<compile_context>
chip_gen: v6e
topology: v6e:2x2x1
jax: 0.10.0
libtpu: 0.0.40
codegen_flags: <defaults>
</compile_context>

<pallas_src>
import functools

import jax
import jax.numpy as jnp
from jax.experimental import pallas as pl
from jax.experimental.pallas import tpu as pltpu

HP = 128   # padded hidden width (lanes) per gate block
CP = 128   # padded classifier output width (lanes)


def lstm_classifier_kernel(x_ref,      # (T*Bp, I)   time-major, batch padded
                           wih_ref,    # (I, 4*HP)   W_ih^T, gate blocks padded to 128 lanes
                           whh_ref,    # (HP, 4*HP)  W_hh^T, padded rows + gate blocks
                           b_ref,      # (1, 4*HP)   b_ih + b_hh, padded
                           wfc_ref,    # (HP, CP)    fc.weight^T, padded
                           bfc_ref,    # (1, CP)     fc.bias, padded
                           out_ref,    # (Bp, CP)    padded logits
                           gx_scr):    # (T*Bp, 4*HP) VMEM scratch: precomputed input gates
    Bp = out_ref.shape[0]
    T = x_ref.shape[0] // Bp
    Hp = whh_ref.shape[0]

    # --- Input projection for all time steps in one MXU call (+ bias), outside
    # the serial recurrence. Padded gate lanes get exactly 0 here (zero weight
    # columns, zero bias).
    gx_scr[...] = (jnp.dot(x_ref[...], wih_ref[...],
                           preferred_element_type=jnp.float32)
                   + b_ref[...])

    # h / c live in vregs for the whole loop (1 vreg each at (8,128) f32).
    # Padded lanes stay exactly 0: gates there are 0 -> i=f=o=0.5, g=0 ->
    # c_pad = 0.5*c_pad = 0, h_pad = 0.
    h = jnp.zeros((Bp, Hp), jnp.float32)
    c = jnp.zeros((Bp, Hp), jnp.float32)

    # Fully unrolled recurrence (T is small and static); all slices static
    # and lane/sublane aligned.  W_hh is loaded per step (short live range;
    # a hoisted load would be 64 live vregs and force spills).
    for t in range(T):
        gates = gx_scr[pl.ds(t * Bp, Bp), :] + jnp.dot(
            h, whh_ref[...], preferred_element_type=jnp.float32)   # (Bp, 4*HP)
        i_g = jax.nn.sigmoid(gates[:, 0 * Hp:1 * Hp])
        f_g = jax.nn.sigmoid(gates[:, 1 * Hp:2 * Hp])
        g_g = jnp.tanh(gates[:, 2 * Hp:3 * Hp])
        o_g = jax.nn.sigmoid(gates[:, 3 * Hp:4 * Hp])
        c = f_g * c + i_g * g_g
        h = o_g * jnp.tanh(c)

    # Final classifier on the last hidden state (lane-dense 128-wide store).
    out_ref[...] = (jnp.dot(h, wfc_ref[...], preferred_element_type=jnp.float32)
                    + bfc_ref[...])


def prepare_params(w_ih, w_hh, b_ih, b_hh, fc_w, fc_b):
    """One-time weight prep (do NOT call per forward): transpose to row-major
    `x @ W` layout and pad each gate block / the classifier to full 128-lane
    slabs so all in-kernel slices are lane-aligned."""
    four_h, _ = w_ih.shape
    h = w_hh.shape[1]
    c = fc_w.shape[0]
    assert four_h == 4 * h and h <= HP and c <= CP

    def pad_gate_cols(w_t):                       # (rows, 4H) -> (rows, 4*HP)
        rows = w_t.shape[0]
        w4 = w_t.reshape(rows, 4, h)
        return jnp.pad(w4, ((0, 0), (0, 0), (0, HP - h))).reshape(rows, 4 * HP)

    wih_t = pad_gate_cols(w_ih.T.astype(jnp.float32))                   # (I, 4HP)
    whh_t = pad_gate_cols(w_hh.T.astype(jnp.float32))                   # (H, 4HP)
    whh_t = jnp.pad(whh_t, ((0, HP - h), (0, 0)))                       # (HP, 4HP)
    b = pad_gate_cols((b_ih + b_hh).astype(jnp.float32).reshape(1, 4 * h))  # (1, 4HP)
    wfc_t = jnp.pad(fc_w.T.astype(jnp.float32), ((0, HP - h), (0, CP - c)))  # (HP, CP)
    bfc = jnp.pad(fc_b.astype(jnp.float32).reshape(1, c), ((0, 0), (0, CP - c)))  # (1, CP)
    return wih_t, whh_t, b, wfc_t, bfc


@functools.partial(jax.jit, static_argnames=("num_classes",))
def lstm_classifier_fwd(x, wih_t, whh_t, b, wfc_t, bfc, *, num_classes):
    """x: (B, T, I) float32 (batch_first, like PyTorch). Weights pre-prepared
    by prepare_params(). Returns (B, num_classes) logits."""
    B, T, I = x.shape
    Bp = ((B + 7) // 8) * 8                                # pad batch to 8 sublanes

    x_tm = jnp.transpose(x.astype(jnp.float32), (1, 0, 2))  # (T, B, I) time-major
    x_tm = jnp.pad(x_tm, ((0, 0), (0, Bp - B), (0, 0)))     # (T, Bp, I)
    x_flat = x_tm.reshape(T * Bp, I)                        # (T*Bp, I)

    vmem = pl.BlockSpec(memory_space=pltpu.MemorySpace.VMEM)

    out_padded = pl.pallas_call(
        lstm_classifier_kernel,
        out_shape=jax.ShapeDtypeStruct((Bp, CP), jnp.float32),
        in_specs=[vmem] * 6,
        out_specs=vmem,
        scratch_shapes=[
            pltpu.VMEM((T * Bp, 4 * HP), jnp.float32),      # precomputed input gates
        ],
    )(x_flat, wih_t, whh_t, b, wfc_t, bfc)

    return out_padded[:B, :num_classes]


def reference_forward(x, w_ih, w_hh, b_ih, b_hh, fc_w, fc_b):
    """Pure-JAX reference matching torch.nn.LSTM (gate order i,f,g,o)."""
    B, T, I = x.shape
    H = w_hh.shape[1]
    h = jnp.zeros((B, H), jnp.float32)
    c = jnp.zeros((B, H), jnp.float32)
    for t in range(T):
        gates = x[:, t, :] @ w_ih.T + b_ih + h @ w_hh.T + b_hh
        i = jax.nn.sigmoid(gates[:, 0 * H:1 * H])
        f = jax.nn.sigmoid(gates[:, 1 * H:2 * H])
        g = jnp.tanh(gates[:, 2 * H:3 * H])
        o = jax.nn.sigmoid(gates[:, 3 * H:4 * H])
        c = f * c + i * g
        h = o * jnp.tanh(c)
    return h @ fc_w.T + fc_b


if __name__ == "__main__":
    B, T = 2, 8
    INPUT_SIZE, HIDDEN, NUM_CLASSES = 5, 64, 3

    key = jax.random.PRNGKey(0)
    keys = jax.random.split(key, 8)
    bound = 1.0 / jnp.sqrt(HIDDEN)

    x = jax.random.normal(keys[0], (B, T, INPUT_SIZE), jnp.float32)
    w_ih = jax.random.uniform(keys[1], (4 * HIDDEN, INPUT_SIZE), jnp.float32, -bound, bound)
    w_hh = jax.random.uniform(keys[2], (4 * HIDDEN, HIDDEN), jnp.float32, -bound, bound)
    b_ih = jax.random.uniform(keys[3], (4 * HIDDEN,), jnp.float32, -bound, bound)
    b_hh = jax.random.uniform(keys[4], (4 * HIDDEN,), jnp.float32, -bound, bound)
    fc_w = jax.random.uniform(keys[5], (NUM_CLASSES, HIDDEN), jnp.float32, -bound, bound)
    fc_b = jax.random.uniform(keys[6], (NUM_CLASSES,), jnp.float32, -bound, bound)

    # One-time weight preparation (model-load time, not per call).
    params = jax.block_until_ready(
        prepare_params(w_ih, w_hh, b_ih, b_hh, fc_w, fc_b))

    out = lstm_classifier_fwd(x, *params, num_classes=NUM_CLASSES)
    out = jax.block_until_ready(out)

    ref = reference_forward(x, w_ih, w_hh, b_ih, b_hh, fc_w, fc_b)
    assert out.shape == (B, NUM_CLASSES)
    assert jnp.allclose(out, ref, rtol=1e-4, atol=1e-4), (out, ref)

    print("KERNEL_OK")
</pallas_src>

<mosaic_0001>
module attributes {stable_mosaic.version = 11 : i64} {
  func.func @lstm_classifier_kernel(%arg0: memref<64x5xf32, #tpu.memory_space<vmem>>, %arg1: memref<5x512xf32, #tpu.memory_space<vmem>>, %arg2: memref<128x512xf32, #tpu.memory_space<vmem>>, %arg3: memref<1x512xf32, #tpu.memory_space<vmem>>, %arg4: memref<128x128xf32, #tpu.memory_space<vmem>>, %arg5: memref<1x128xf32, #tpu.memory_space<vmem>>, %arg6: memref<8x128xf32, #tpu.memory_space<vmem>>, %arg7: memref<64x512xf32, #tpu.memory_space<vmem>>) attributes {dimension_semantics = [], scalar_prefetch = 0 : i64, scratch_operands = 1 : i64, tpu.core_type = #tpu.core_type<tc>} {
    %c0 = arith.constant 0 : index
    %c0_0 = arith.constant 0 : index
    %0 = vector.load %arg0[%c0, %c0_0] : memref<64x5xf32, #tpu.memory_space<vmem>>, vector<64x5xf32>
    %c0_1 = arith.constant 0 : index
    %c0_2 = arith.constant 0 : index
    %1 = vector.load %arg1[%c0_1, %c0_2] : memref<5x512xf32, #tpu.memory_space<vmem>>, vector<5x512xf32>
    %cst = arith.constant dense<0.000000e+00> : vector<64x512xf32>
    %2 = tpu.matmul %0, %1, %cst {dimension_numbers = #tpu.dot_dimension_numbers<[1], [0], [0], [1], [0, 0, 1, 1], [], []>} : vector<64x5xf32>, vector<5x512xf32>, vector<64x512xf32> -> vector<64x512xf32>
    %c0_3 = arith.constant 0 : index
    %c0_4 = arith.constant 0 : index
    %3 = vector.load %arg3[%c0_3, %c0_4] : memref<1x512xf32, #tpu.memory_space<vmem>>, vector<1x512xf32>
    %4 = vector.broadcast %3 : vector<1x512xf32> to vector<64x512xf32>
    %5 = arith.addf %2, %4 : vector<64x512xf32>
    %c0_5 = arith.constant 0 : index
    %c0_6 = arith.constant 0 : index
    %6 = vector.load %arg7[%c0_5, %c0_6] : memref<64x512xf32, #tpu.memory_space<vmem>>, vector<64x512xf32>
    tpu.vector_store %arg7[%c0_5, %c0_6], %5 {strides = array<i32>} : memref<64x512xf32, #tpu.memory_space<vmem>>, vector<64x512xf32>,
    %cst_7 = arith.constant 0.000000e+00 : f32
    %7 = vector.broadcast %cst_7 : f32 to vector<8x128xf32>
    %cst_8 = arith.constant 0.000000e+00 : f32
    %8 = vector.broadcast %cst_8 : f32 to vector<8x128xf32>
    %c0_9 = arith.constant 0 : index
    %c0_10 = arith.constant 0 : index
    %9 = vector.load %arg7[%c0_9, %c0_10] : memref<64x512xf32, #tpu.memory_space<vmem>>, vector<8x512xf32>
    %c0_11 = arith.constant 0 : index
    %c0_12 = arith.constant 0 : index
    %10 = vector.load %arg2[%c0_11, %c0_12] : memref<128x512xf32, #tpu.memory_space<vmem>>, vector<128x512xf32>
    %cst_13 = arith.constant dense<0.000000e+00> : vector<8x512xf32>
    %11 = tpu.matmul %7, %10, %cst_13 {dimension_numbers = #tpu.dot_dimension_numbers<[1], [0], [0], [1], [0, 0, 1, 1], [], []>} : vector<8x128xf32>, vector<128x512xf32>, vector<8x512xf32> -> vector<8x512xf32>
    %12 = arith.addf %9, %11 : vector<8x512xf32>
    %13 = vector.extract_strided_slice %12 {offsets = [0, 0], sizes = [8, 128], strides = [1, 1]} : vector<8x512xf32> to vector<8x128xf32>
    %14 = arith.negf %13 : vector<8x128xf32>
    %15 = math.exp %14 : vector<8x128xf32>
    %cst_14 = arith.constant 1.000000e+00 : f32
    %16 = vector.broadcast %cst_14 : f32 to vector<8x128xf32>
    %17 = arith.addf %16, %15 : vector<8x128xf32>
    %18 = arith.divf %16, %17 : vector<8x128xf32>
    %19 = vector.extract_strided_slice %12 {offsets = [0, 128], sizes = [8, 128], strides = [1, 1]} : vector<8x512xf32> to vector<8x128xf32>
    %20 = arith.negf %19 : vector<8x128xf32>
    %21 = math.exp %20 : vector<8x128xf32>
    %cst_15 = arith.constant 1.000000e+00 : f32
    %22 = vector.broadcast %cst_15 : f32 to vector<8x128xf32>
    %23 = arith.addf %22, %21 : vector<8x128xf32>
    %24 = arith.divf %22, %23 : vector<8x128xf32>
    %25 = vector.extract_strided_slice %12 {offsets = [0, 256], sizes = [8, 128], strides = [1, 1]} : vector<8x512xf32> to vector<8x128xf32>
    %26 = math.tanh %25 : vector<8x128xf32>
    %27 = vector.extract_strided_slice %12 {offsets = [0, 384], sizes = [8, 128], strides = [1, 1]} : vector<8x512xf32> to vector<8x128xf32>
    %28 = arith.negf %27 : vector<8x128xf32>
    %29 = math.exp %28 : vector<8x128xf32>
    %cst_16 = arith.constant 1.000000e+00 : f32
    %30 = vector.broadcast %cst_16 : f32 to vector<8x128xf32>
    %31 = arith.addf %30, %29 : vector<8x128xf32>
    %32 = arith.divf %30, %31 : vector<8x128xf32>
    %33 = arith.mulf %24, %8 : vector<8x128xf32>
    %34 = arith.mulf %18, %26 : vector<8x128xf32>
    %35 = arith.addf %33, %34 : vector<8x128xf32>
    %36 = math.tanh %35 : vector<8x128xf32>
    %37 = arith.mulf %32, %36 : vector<8x128xf32>
    %c8 = arith.constant 8 : index
    %c0_17 = arith.constant 0 : index
    %38 = vector.load %arg7[%c8, %c0_17] : memref<64x512xf32, #tpu.memory_space<vmem>>, vector<8x512xf32>
    %c0_18 = arith.constant 0 : index
    %c0_19 = arith.constant 0 : index
    %39 = vector.load %arg2[%c0_18, %c0_19] : memref<128x512xf32, #tpu.memory_space<vmem>>, vector<128x512xf32>
    %cst_20 = arith.constant dense<0.000000e+00> : vector<8x512xf32>
    %40 = tpu.matmul %37, %39, %cst_20 {dimension_numbers = #tpu.dot_dimension_numbers<[1], [0], [0], [1], [0, 0, 1, 1], [], []>} : vector<8x128xf32>, vector<128x512xf32>, vector<8x512xf32> -> vector<8x512xf32>
    %41 = arith.addf %38, %40 : vector<8x512xf32>
    %42 = vector.extract_strided_slice %41 {offsets = [0, 0], sizes = [8, 128], strides = [1, 1]} : vector<8x512xf32> to vector<8x128xf32>
    %43 = arith.negf %42 : vector<8x128xf32>
    %44 = math.exp %43 : vector<8x128xf32>
    %cst_21 = arith.constant 1.000000e+00 : f32
    %45 = vector.broadcast %cst_21 : f32 to vector<8x128xf32>
    %46 = arith.addf %45, %44 : vector<8x128xf32>
    %47 = arith.divf %45, %46 : vector<8x128xf32>
    %48 = vector.extract_strided_slice %41 {offsets = [0, 128], sizes = [8, 128], strides = [1, 1]} : vector<8x512xf32> to vector<8x128xf32>
    %49 = arith.negf %48 : vector<8x128xf32>
    %50 = math.exp %49 : vector<8x128xf32>
    %cst_22 = arith.constant 1.000000e+00 : f32
    %51 = vector.broadcast %cst_22 : f32 to vector<8x128xf32>
    %52 = arith.addf %51, %50 : vector<8x128xf32>
    %53 = arith.divf %51, %52 : vector<8x128xf32>
    %54 = vector.extract_strided_slice %41 {offsets = [0, 256], sizes = [8, 128], strides = [1, 1]} : vector<8x512xf32> to vector<8x128xf32>
    %55 = math.tanh %54 : vector<8x128xf32>
    %56 = vector.extract_strided_slice %41 {offsets = [0, 384], sizes = [8, 128], strides = [1, 1]} : vector<8x512xf32> to vector<8x128xf32>
    %57 = arith.negf %56 : vector<8x128xf32>
    %58 = math.exp %57 : vector<8x128xf32>
    %cst_23 = arith.constant 1.000000e+00 : f32
    %59 = vector.broadcast %cst_23 : f32 to vector<8x128xf32>
    %60 = arith.addf %59, %58 : vector<8x128xf32>
    %61 = arith.divf %59, %60 : vector<8x128xf32>
    %62 = arith.mulf %53, %35 : vector<8x128xf32>
    %63 = arith.mulf %47, %55 : vector<8x128xf32>
    %64 = arith.addf %62, %63 : vector<8x128xf32>
    %65 = math.tanh %64 : vector<8x128xf32>
    %66 = arith.mulf %61, %65 : vector<8x128xf32>
    %c16 = arith.constant 16 : index
    %c0_24 = arith.constant 0 : index
    %67 = vector.load %arg7[%c16, %c0_24] : memref<64x512xf32, #tpu.memory_space<vmem>>, vector<8x512xf32>
    %c0_25 = arith.constant 0 : index
    %c0_26 = arith.constant 0 : index
    %68 = vector.load %arg2[%c0_25, %c0_26] : memref<128x512xf32, #tpu.memory_space<vmem>>, vector<128x512xf32>
    %cst_27 = arith.constant dense<0.000000e+00> : vector<8x512xf32>
    %69 = tpu.matmul %66, %68, %cst_27 {dimension_numbers = #tpu.dot_dimension_numbers<[1], [0], [0], [1], [0, 0, 1, 1], [], []>} : vector<8x128xf32>, vector<128x512xf32>, vector<8x512xf32> -> vector<8x512xf32>
    %70 = arith.addf %67, %69 : vector<8x512xf32>
    %71 = vector.extract_strided_slice %70 {offsets = [0, 0], sizes = [8, 128], strides = [1, 1]} : vector<8x512xf32> to vector<8x128xf32>
    %72 = arith.negf %71 : vector<8x128xf32>
    %73 = math.exp %72 : vector<8x128xf32>
    %cst_28 = arith.constant 1.000000e+00 : f32
    %74 = vector.broadcast %cst_28 : f32 to vector<8x128xf32>
    %75 = arith.addf %74, %73 : vector<8x128xf32>
    %76 = arith.divf %74, %75 : vector<8x128xf32>
    %77 = vector.extract_strided_slice %70 {offsets = [0, 128], sizes = [8, 128], strides = [1, 1]} : vector<8x512xf32> to vector<8x128xf32>
    %78 = arith.negf %77 : vector<8x128xf32>
    %79 = math.exp %78 : vector<8x128xf32>
    %cst_29 = arith.constant 1.000000e+00 : f32
    %80 = vector.broadcast %cst_29 : f32 to vector<8x128xf32>
    %81 = arith.addf %80, %79 : vector<8x128xf32>
    %82 = arith.divf %80, %81 : vector<8x128xf32>
    %83 = vector.extract_strided_slice %70 {offsets = [0, 256], sizes = [8, 128], strides = [1, 1]} : vector<8x512xf32> to vector<8x128xf32>
    %84 = math.tanh %83 : vector<8x128xf32>
    %85 = vector.extract_strided_slice %70 {offsets = [0, 384], sizes = [8, 128], strides = [1, 1]} : vector<8x512xf32> to vector<8x128xf32>
    %86 = arith.negf %85 : vector<8x128xf32>
    %87 = math.exp %86 : vector<8x128xf32>
    %cst_30 = arith.constant 1.000000e+00 : f32
    %88 = vector.broadcast %cst_30 : f32 to vector<8x128xf32>
    %89 = arith.addf %88, %87 : vector<8x128xf32>
    %90 = arith.divf %88, %89 : vector<8x128xf32>
    %91 = arith.mulf %82, %64 : vector<8x128xf32>
    %92 = arith.mulf %76, %84 : vector<8x128xf32>
    %93 = arith.addf %91, %92 : vector<8x128xf32>
    %94 = math.tanh %93 : vector<8x128xf32>
    %95 = arith.mulf %90, %94 : vector<8x128xf32>
    %c24 = arith.constant 24 : index
    %c0_31 = arith.constant 0 : index
    %96 = vector.load %arg7[%c24, %c0_31] : memref<64x512xf32, #tpu.memory_space<vmem>>, vector<8x512xf32>
    %c0_32 = arith.constant 0 : index
    %c0_33 = arith.constant 0 : index
    %97 = vector.load %arg2[%c0_32, %c0_33] : memref<128x512xf32, #tpu.memory_space<vmem>>, vector<128x512xf32>
    %cst_34 = arith.constant dense<0.000000e+00> : vector<8x512xf32>
    %98 = tpu.matmul %95, %97, %cst_34 {dimension_numbers = #tpu.dot_dimension_numbers<[1], [0], [0], [1], [0, 0, 1, 1], [], []>} : vector<8x128xf32>, vector<128x512xf32>, vector<8x512xf32> -> vector<8x512xf32>
    %99 = arith.addf %96, %98 : vector<8x512xf32>
    %100 = vector.extract_strided_slice %99 {offsets = [0, 0], sizes = [8, 128], strides = [1, 1]} : vector<8x512xf32> to vector<8x128xf32>
    %101 = arith.negf %100 : vector<8x128xf32>
    %102 = math.exp %101 : vector<8x128xf32>
    %cst_35 = arith.constant 1.000000e+00 : f32
    %103 = vector.broadcast %cst_35 : f32 to vector<8x128xf32>
    %104 = arith.addf %103, %102 : vector<8x128xf32>
    %105 = arith.divf %103, %104 : vector<8x128xf32>
    %106 = vector.extract_strided_slice %99 {offsets = [0, 128], sizes = [8, 128], strides = [1, 1]} : vector<8x512xf32> to vector<8x128xf32>
    %107 = arith.negf %106 : vector<8x128xf32>
    %108 = math.exp %107 : vector<8x128xf32>
    %cst_36 = arith.constant 1.000000e+00 : f32
    %109 = vector.broadcast %cst_36 : f32 to vector<8x128xf32>
    %110 = arith.addf %109, %108 : vector<8x128xf32>
    %111 = arith.divf %109, %110 : vector<8x128xf32>
    %112 = vector.extract_strided_slice %99 {offsets = [0, 256], sizes = [8, 128], strides = [1, 1]} : vector<8x512xf32> to vector<8x128xf32>
    %113 = math.tanh %112 : vector<8x128xf32>
    %114 = vector.extract_strided_slice %99 {offsets = [0, 384], sizes = [8, 128], strides = [1, 1]} : vector<8x512xf32> to vector<8x128xf32>
    %115 = arith.negf %114 : vector<8x128xf32>
    %116 = math.exp %115 : vector<8x128xf32>
    %cst_37 = arith.constant 1.000000e+00 : f32
    %117 = vector.broadcast %cst_37 : f32 to vector<8x128xf32>
    %118 = arith.addf %117, %116 : vector<8x128xf32>
    %119 = arith.divf %117, %118 : vector<8x128xf32>
    %120 = arith.mulf %111, %93 : vector<8x128xf32>
    %121 = arith.mulf %105, %113 : vector<8x128xf32>
    %122 = arith.addf %120, %121 : vector<8x128xf32>
    %123 = math.tanh %122 : vector<8x128xf32>
    %124 = arith.mulf %119, %123 : vector<8x128xf32>
    %c32 = arith.constant 32 : index
    %c0_38 = arith.constant 0 : index
    %125 = vector.load %arg7[%c32, %c0_38] : memref<64x512xf32, #tpu.memory_space<vmem>>, vector<8x512xf32>
    %c0_39 = arith.constant 0 : index
    %c0_40 = arith.constant 0 : index
    %126 = vector.load %arg2[%c0_39, %c0_40] : memref<128x512xf32, #tpu.memory_space<vmem>>, vector<128x512xf32>
    %cst_41 = arith.constant dense<0.000000e+00> : vector<8x512xf32>
    %127 = tpu.matmul %124, %126, %cst_41 {dimension_numbers = #tpu.dot_dimension_numbers<[1], [0], [0], [1], [0, 0, 1, 1], [], []>} : vector<8x128xf32>, vector<128x512xf32>, vector<8x512xf32> -> vector<8x512xf32>
    %128 = arith.addf %125, %127 : vector<8x512xf32>
    %129 = vector.extract_strided_slice %128 {offsets = [0, 0], sizes = [8, 128], strides = [1, 1]} : vector<8x512xf32> to vector<8x128xf32>
    %130 = arith.negf %129 : vector<8x128xf32>
    %131 = math.exp %130 : vector<8x128xf32>
    %cst_42 = arith.constant 1.000000e+00 : f32
    %132 = vector.broadcast %cst_42 : f32 to vector<8x128xf32>
    %133 = arith.addf %132, %131 : vector<8x128xf32>
    %134 = arith.divf %132, %133 : vector<8x128xf32>
    %135 = vector.extract_strided_slice %128 {offsets = [0, 128], sizes = [8, 128], strides = [1, 1]} : vector<8x512xf32> to vector<8x128xf32>
    %136 = arith.negf %135 : vector<8x128xf32>
    %137 = math.exp %136 : vector<8x128xf32>
    %cst_43 = arith.constant 1.000000e+00 : f32
    %138 = vector.broadcast %cst_43 : f32 to vector<8x128xf32>
    %139 = arith.addf %138, %137 : vector<8x128xf32>
    %140 = arith.divf %138, %139 : vector<8x128xf32>
    %141 = vector.extract_strided_slice %128 {offsets = [0, 256], sizes = [8, 128], strides = [1, 1]} : vector<8x512xf32> to vector<8x128xf32>
    %142 = math.tanh %141 : vector<8x128xf32>
    %143 = vector.extract_strided_slice %128 {offsets = [0, 384], sizes = [8, 128], strides = [1, 1]} : vector<8x512xf32> to vector<8x128xf32>
    %144 = arith.negf %143 : vector<8x128xf32>
    %145 = math.exp %144 : vector<8x128xf32>
    %cst_44 = arith.constant 1.000000e+00 : f32
    %146 = vector.broadcast %cst_44 : f32 to vector<8x128xf32>
    %147 = arith.addf %146, %145 : vector<8x128xf32>
    %148 = arith.divf %146, %147 : vector<8x128xf32>
    %149 = arith.mulf %140, %122 : vector<8x128xf32>
    %150 = arith.mulf %134, %142 : vector<8x128xf32>
    %151 = arith.addf %149, %150 : vector<8x128xf32>
    %152 = math.tanh %151 : vector<8x128xf32>
    %153 = arith.mulf %148, %152 : vector<8x128xf32>
    %c40 = arith.constant 40 : index
    %c0_45 = arith.constant 0 : index
    %154 = vector.load %arg7[%c40, %c0_45] : memref<64x512xf32, #tpu.memory_space<vmem>>, vector<8x512xf32>
    %c0_46 = arith.constant 0 : index
    %c0_47 = arith.constant 0 : index
    %155 = vector.load %arg2[%c0_46, %c0_47] : memref<128x512xf32, #tpu.memory_space<vmem>>, vector<128x512xf32>
    %cst_48 = arith.constant dense<0.000000e+00> : vector<8x512xf32>
    %156 = tpu.matmul %153, %155, %cst_48 {dimension_numbers = #tpu.dot_dimension_numbers<[1], [0], [0], [1], [0, 0, 1, 1], [], []>} : vector<8x128xf32>, vector<128x512xf32>, vector<8x512xf32> -> vector<8x512xf32>
    %157 = arith.addf %154, %156 : vector<8x512xf32>
    %158 = vector.extract_strided_slice %157 {offsets = [0, 0], sizes = [8, 128], strides = [1, 1]} : vector<8x512xf32> to vector<8x128xf32>
    %159 = arith.negf %158 : vector<8x128xf32>
    %160 = math.exp %159 : vector<8x128xf32>
    %cst_49 = arith.constant 1.000000e+00 : f32
    %161 = vector.broadcast %cst_49 : f32 to vector<8x128xf32>
    %162 = arith.addf %161, %160 : vector<8x128xf32>
    %163 = arith.divf %161, %162 : vector<8x128xf32>
    %164 = vector.extract_strided_slice %157 {offsets = [0, 128], sizes = [8, 128], strides = [1, 1]} : vector<8x512xf32> to vector<8x128xf32>
    %165 = arith.negf %164 : vector<8x128xf32>
    %166 = math.exp %165 : vector<8x128xf32>
    %cst_50 = arith.constant 1.000000e+00 : f32
    %167 = vector.broadcast %cst_50 : f32 to vector<8x128xf32>
    %168 = arith.addf %167, %166 : vector<8x128xf32>
    %169 = arith.divf %167, %168 : vector<8x128xf32>
    %170 = vector.extract_strided_slice %157 {offsets = [0, 256], sizes = [8, 128], strides = [1, 1]} : vector<8x512xf32> to vector<8x128xf32>
    %171 = math.tanh %170 : vector<8x128xf32>
    %172 = vector.extract_strided_slice %157 {offsets = [0, 384], sizes = [8, 128], strides = [1, 1]} : vector<8x512xf32> to vector<8x128xf32>
    %173 = arith.negf %172 : vector<8x128xf32>
    %174 = math.exp %173 : vector<8x128xf32>
    %cst_51 = arith.constant 1.000000e+00 : f32
    %175 = vector.broadcast %cst_51 : f32 to vector<8x128xf32>
    %176 = arith.addf %175, %174 : vector<8x128xf32>
    %177 = arith.divf %175, %176 : vector<8x128xf32>
    %178 = arith.mulf %169, %151 : vector<8x128xf32>
    %179 = arith.mulf %163, %171 : vector<8x128xf32>
    %180 = arith.addf %178, %179 : vector<8x128xf32>
    %181 = math.tanh %180 : vector<8x128xf32>
    %182 = arith.mulf %177, %181 : vector<8x128xf32>
    %c48 = arith.constant 48 : index
    %c0_52 = arith.constant 0 : index
    %183 = vector.load %arg7[%c48, %c0_52] : memref<64x512xf32, #tpu.memory_space<vmem>>, vector<8x512xf32>
    %c0_53 = arith.constant 0 : index
    %c0_54 = arith.constant 0 : index
    %184 = vector.load %arg2[%c0_53, %c0_54] : memref<128x512xf32, #tpu.memory_space<vmem>>, vector<128x512xf32>
    %cst_55 = arith.constant dense<0.000000e+00> : vector<8x512xf32>
    %185 = tpu.matmul %182, %184, %cst_55 {dimension_numbers = #tpu.dot_dimension_numbers<[1], [0], [0], [1], [0, 0, 1, 1], [], []>} : vector<8x128xf32>, vector<128x512xf32>, vector<8x512xf32> -> vector<8x512xf32>
    %186 = arith.addf %183, %185 : vector<8x512xf32>
    %187 = vector.extract_strided_slice %186 {offsets = [0, 0], sizes = [8, 128], strides = [1, 1]} : vector<8x512xf32> to vector<8x128xf32>
    %188 = arith.negf %187 : vector<8x128xf32>
    %189 = math.exp %188 : vector<8x128xf32>
    %cst_56 = arith.constant 1.000000e+00 : f32
    %190 = vector.broadcast %cst_56 : f32 to vector<8x128xf32>
    %191 = arith.addf %190, %189 : vector<8x128xf32>
    %192 = arith.divf %190, %191 : vector<8x128xf32>
    %193 = vector.extract_strided_slice %186 {offsets = [0, 128], sizes = [8, 128], strides = [1, 1]} : vector<8x512xf32> to vector<8x128xf32>
    %194 = arith.negf %193 : vector<8x128xf32>
    %195 = math.exp %194 : vector<8x128xf32>
    %cst_57 = arith.constant 1.000000e+00 : f32
    %196 = vector.broadcast %cst_57 : f32 to vector<8x128xf32>
    %197 = arith.addf %196, %195 : vector<8x128xf32>
    %198 = arith.divf %196, %197 : vector<8x128xf32>
    %199 = vector.extract_strided_slice %186 {offsets = [0, 256], sizes = [8, 128], strides = [1, 1]} : vector<8x512xf32> to vector<8x128xf32>
    %200 = math.tanh %199 : vector<8x128xf32>
    %201 = vector.extract_strided_slice %186 {offsets = [0, 384], sizes = [8, 128], strides = [1, 1]} : vector<8x512xf32> to vector<8x128xf32>
    %202 = arith.negf %201 : vector<8x128xf32>
    %203 = math.exp %202 : vector<8x128xf32>
    %cst_58 = arith.constant 1.000000e+00 : f32
    %204 = vector.broadcast %cst_58 : f32 to vector<8x128xf32>
    %205 = arith.addf %204, %203 : vector<8x128xf32>
    %206 = arith.divf %204, %205 : vector<8x128xf32>
    %207 = arith.mulf %198, %180 : vector<8x128xf32>
    %208 = arith.mulf %192, %200 : vector<8x128xf32>
    %209 = arith.addf %207, %208 : vector<8x128xf32>
    %210 = math.tanh %209 : vector<8x128xf32>
    %211 = arith.mulf %206, %210 : vector<8x128xf32>
    %c56 = arith.constant 56 : index
    %c0_59 = arith.constant 0 : index
    %212 = vector.load %arg7[%c56, %c0_59] : memref<64x512xf32, #tpu.memory_space<vmem>>, vector<8x512xf32>
    %c0_60 = arith.constant 0 : index
    %c0_61 = arith.constant 0 : index
    %213 = vector.load %arg2[%c0_60, %c0_61] : memref<128x512xf32, #tpu.memory_space<vmem>>, vector<128x512xf32>
    %cst_62 = arith.constant dense<0.000000e+00> : vector<8x512xf32>
    %214 = tpu.matmul %211, %213, %cst_62 {dimension_numbers = #tpu.dot_dimension_numbers<[1], [0], [0], [1], [0, 0, 1, 1], [], []>} : vector<8x128xf32>, vector<128x512xf32>, vector<8x512xf32> -> vector<8x512xf32>
    %215 = arith.addf %212, %214 : vector<8x512xf32>
    %216 = vector.extract_strided_slice %215 {offsets = [0, 0], sizes = [8, 128], strides = [1, 1]} : vector<8x512xf32> to vector<8x128xf32>
    %217 = arith.negf %216 : vector<8x128xf32>
    %218 = math.exp %217 : vector<8x128xf32>
    %cst_63 = arith.constant 1.000000e+00 : f32
    %219 = vector.broadcast %cst_63 : f32 to vector<8x128xf32>
    %220 = arith.addf %219, %218 : vector<8x128xf32>
    %221 = arith.divf %219, %220 : vector<8x128xf32>
    %222 = vector.extract_strided_slice %215 {offsets = [0, 128], sizes = [8, 128], strides = [1, 1]} : vector<8x512xf32> to vector<8x128xf32>
    %223 = arith.negf %222 : vector<8x128xf32>
    %224 = math.exp %223 : vector<8x128xf32>
    %cst_64 = arith.constant 1.000000e+00 : f32
    %225 = vector.broadcast %cst_64 : f32 to vector<8x128xf32>
    %226 = arith.addf %225, %224 : vector<8x128xf32>
    %227 = arith.divf %225, %226 : vector<8x128xf32>
    %228 = vector.extract_strided_slice %215 {offsets = [0, 256], sizes = [8, 128], strides = [1, 1]} : vector<8x512xf32> to vector<8x128xf32>
    %229 = math.tanh %228 : vector<8x128xf32>
    %230 = vector.extract_strided_slice %215 {offsets = [0, 384], sizes = [8, 128], strides = [1, 1]} : vector<8x512xf32> to vector<8x128xf32>
    %231 = arith.negf %230 : vector<8x128xf32>
    %232 = math.exp %231 : vector<8x128xf32>
    %cst_65 = arith.constant 1.000000e+00 : f32
    %233 = vector.broadcast %cst_65 : f32 to vector<8x128xf32>
    %234 = arith.addf %233, %232 : vector<8x128xf32>
    %235 = arith.divf %233, %234 : vector<8x128xf32>
    %236 = arith.mulf %227, %209 : vector<8x128xf32>
    %237 = arith.mulf %221, %229 : vector<8x128xf32>
    %238 = arith.addf %236, %237 : vector<8x128xf32>
    %239 = math.tanh %238 : vector<8x128xf32>
    %240 = arith.mulf %235, %239 : vector<8x128xf32>
    %c0_66 = arith.constant 0 : index
    %c0_67 = arith.constant 0 : index
    %241 = vector.load %arg4[%c0_66, %c0_67] : memref<128x128xf32, #tpu.memory_space<vmem>>, vector<128x128xf32>
    %cst_68 = arith.constant dense<0.000000e+00> : vector<8x128xf32>
    %242 = tpu.matmul %240, %241, %cst_68 {dimension_numbers = #tpu.dot_dimension_numbers<[1], [0], [0], [1], [0, 0, 1, 1], [], []>} : vector<8x128xf32>, vector<128x128xf32>, vector<8x128xf32> -> vector<8x128xf32>
    %c0_69 = arith.constant 0 : index
    %c0_70 = arith.constant 0 : index
    %243 = vector.load %arg5[%c0_69, %c0_70] : memref<1x128xf32, #tpu.memory_space<vmem>>, vector<1x128xf32>
    %244 = vector.broadcast %243 : vector<1x128xf32> to vector<8x128xf32>
    %245 = arith.addf %242, %244 : vector<8x128xf32>
    %c0_71 = arith.constant 0 : index
    %c0_72 = arith.constant 0 : index
    %246 = vector.load %arg6[%c0_71, %c0_72] : memref<8x128xf32, #tpu.memory_space<vmem>>, vector<8x128xf32>
    tpu.vector_store %arg6[%c0_71, %c0_72], %245 {strides = array<i32>} : memref<8x128xf32, #tpu.memory_space<vmem>>, vector<8x128xf32>,
    return
  }
}

</mosaic_0001>

<llo_original>
// kernel: lstm_classifier_fwd.1
$region0: #{lstm_classifier_fwd.1}
  #allocation0 [shape = 'u32[]', space=smem, size = 0x4, offset = 0x4, fixed_abs, tag = 'smem constant byte address 0x4 - core index']
  #allocation1 [shape = 'u32[144,128]{1,0:T(1,128)}', space=vmem, size = 0x12000, scoped, tag = 'internal scratch']
  #allocation2 [shape = 'f32[64,512]{1,0:T(8,128)}', space=vmem, size = 0x20000, scoped, tag = 'scratch operand']
  %s0 = inlined_call_operand.vmem [shape: f32[64,5], index: 0, kind: input, shape index: {}]
  %s1 = inlined_call_operand.vmem [shape: f32[5,512], index: 1, kind: input, shape index: {}]
  %s2 = inlined_call_operand.hbm [shape: f32[128,512], index: 2, kind: input, shape index: {}]
  %s3 = inlined_call_operand.vmem [shape: f32[1,512], index: 3, kind: input, shape index: {}]
  %s4 = inlined_call_operand.hbm [shape: f32[128,128], index: 4, kind: input, shape index: {}]
  %s5 = inlined_call_operand.vmem [shape: f32[1,128], index: 5, kind: input, shape index: {}]
  %s6 = inlined_call_operand.vmem [shape: f32[8,128], index: 6, kind: output, shape index: {}]
  %s7 = sld [smem:[#allocation0]]
  $region42: #{lstm_classifier_fwd.1} parent=0
    _
  %s9 = ssub.s32 1, %s7
  %s10 = scalar_select 0, %s9, %s7
  $region1: #{lstm_classifier_fwd.1} parent=0
    #allocation3 [shape = 'u8[262144]{0}', space=vmem, size = 0x40000, scoped, tag = 'input window, operand 2, single buffered']
    #allocation4 [shape = 's32[1]{0}', space=sflag, size = 0x4, scoped, tag = 'scoped memory for lstm_classifier_fwd.1']
    #allocation5 [shape = 'u8[65536]{0}', space=vmem, size = 0x10000, scoped, tag = 'input window, operand 4, single buffered']
    #allocation6 [shape = 's32[1]{0}', space=sflag, size = 0x4, scoped, tag = 'scoped memory for lstm_classifier_fwd.1']
    %11 = vsyncpa [#allocation4], 0
    %12 = vsyncpa [#allocation6], 0
    // Predicated region
    $region2: #{lstm_classifier_fwd.1} parent=1 // pred_check
      _
    $region3: #{lstm_classifier_fwd.1} parent=1 // pred_check_branch
      %14 = sbr.rel (0) target = $region5
    $region4: #{lstm_classifier_fwd.1} parent=1 // pred_region
      _
    $region5: #{lstm_classifier_fwd.1} parent=1 // pred_fallthru
      _
    // Predicated region
    $region6: #{lstm_classifier_fwd.1} parent=1 // pred_check
      _
    $region7: #{lstm_classifier_fwd.1} parent=1 // pred_check_branch
      %16 = sbr.rel (0) target = $region9
    $region8: #{lstm_classifier_fwd.1} parent=1 // pred_region
      _
    $region9: #{lstm_classifier_fwd.1} parent=1 // pred_fallthru
      _
    // Predicated region
    $region10: #{lstm_classifier_fwd.1} parent=1 // pred_check
      _
    $region11: #{lstm_classifier_fwd.1} parent=1 // pred_check_branch
      %18 = sbr.rel (0) target = $region13
    $region12: #{lstm_classifier_fwd.1} parent=1 // pred_region
      %s20 = ssub.s32 8192, 8192
      %21 = vsyncadd [#allocation4], %s20
      %s22 = sshll.u32 [#allocation3], 4
      %s23 = int_to_ptr.vmem [resolvable:$true] %s22
      %28 = dma.hbm_to_vmem [thread:$0]  %s2, 8192, %s23, [#allocation4], 512, 512, 32
    $region13: #{lstm_classifier_fwd.1} parent=1 // pred_fallthru
      _
    // Predicated region
    $region14: #{lstm_classifier_fwd.1} parent=1 // pred_check
      _
    $region15: #{lstm_classifier_fwd.1} parent=1 // pred_check_branch
      %30 = sbr.rel (0) target = $region17
    $region16: #{lstm_classifier_fwd.1} parent=1 // pred_region
      _
    $region17: #{lstm_classifier_fwd.1} parent=1 // pred_fallthru
      _
    // Predicated region
    $region18: #{lstm_classifier_fwd.1} parent=1 // pred_check
      _
    $region19: #{lstm_classifier_fwd.1} parent=1 // pred_check_branch
      %32 = sbr.rel (0) target = $region21
    $region20: #{lstm_classifier_fwd.1} parent=1 // pred_region
      %s34 = ssub.s32 2048, 2048
      %35 = vsyncadd [#allocation6], %s34
      %s36 = sshll.u32 [#allocation5], 4
      %s37 = int_to_ptr.vmem [resolvable:$true] %s36
      %42 = dma.hbm_to_vmem [thread:$0]  %s4, 2048, %s37, [#allocation6], 128, 128, 8
    $region21: #{lstm_classifier_fwd.1} parent=1 // pred_fallthru
      _
    // Predicated region
    $region22: #{lstm_classifier_fwd.1} parent=1 // pred_check
      _
    $region23: #{lstm_classifier_fwd.1} parent=1 // pred_check_branch
      %44 = sbr.rel (0) target = $region25
    $region24: #{lstm_classifier_fwd.1} parent=1 // pred_region
      _
    $region25: #{lstm_classifier_fwd.1} parent=1 // pred_fallthru
      _
    // Predicated region
    $region26: #{lstm_classifier_fwd.1} parent=1 // pred_check
      _
    $region27: #{lstm_classifier_fwd.1} parent=1 // pred_check_branch
      %46 = sbr.rel (0) target = $region29
    $region28: #{lstm_classifier_fwd.1} parent=1 // pred_region
      %47 = dma.done [#allocation4], 8192
    $region29: #{lstm_classifier_fwd.1} parent=1 // pred_fallthru
      _
    // Predicated region
    $region30: #{lstm_classifier_fwd.1} parent=1 // pred_check
      _
    $region31: #{lstm_classifier_fwd.1} parent=1 // pred_check_branch
      %49 = sbr.rel (0) target = $region33
    $region32: #{lstm_classifier_fwd.1} parent=1 // pred_region
      %50 = dma.done [#allocation6], 2048
    $region33: #{lstm_classifier_fwd.1} parent=1 // pred_fallthru
      _
    %v51 = vld [vmem:[%s0] sm:$0xff]
    %v52 = vld [vmem:[%s0 + $0x8] sm:$0xff]
    %v53 = vld [vmem:[%s0 + $0x10] sm:$0xff]
    %v54 = vld [vmem:[%s0 + $0x18] sm:$0xff]
    %v55 = vld [vmem:[%s0 + $0x20] sm:$0xff]
    %v56 = vld [vmem:[%s0 + $0x28] sm:$0xff]
    %v57 = vld [vmem:[%s0 + $0x30] sm:$0xff]
    %v58 = vld [vmem:[%s0 + $0x38] sm:$0xff]
    %v59 = vld [vmem:[%s1] sm:$0x1f]
    %v60 = vld [vmem:[%s1 + $0x8] sm:$0x1f]
    %v61 = vld [vmem:[%s1 + $0x10] sm:$0x1f]
    %v62 = vld [vmem:[%s1 + $0x18] sm:$0x1f]
    %v63 = vld [vmem:[%s3] sm:$0xf]
    %v65 = vlaneseq
    %v66 = vshrl.u32 %v65, 7
    %v67 = vsub.s32 0, %v66
    %v68 = vrot.slane %v63, %v67
    %v69 = vlaneseq
    %v70 = vshrl.u32 %v69, 7
    %v71 = vsub.s32 1, %v70
    %v72 = vrot.slane %v63, %v71
    %v73 = vlaneseq
    %v74 = vshrl.u32 %v73, 7
    %v75 = vsub.s32 2, %v74
    %v76 = vrot.slane %v63, %v75
    %v77 = vlaneseq
    %v78 = vshrl.u32 %v77, 7
    %v79 = vsub.s32 3, %v78
    %v80 = vrot.slane %v63, %v79
    %vm85 = vcmask 39936
    %v87 = vsel %vm85, %v51, 0
    %v90 = vsel %vm85, %v52, 0
    %v93 = vsel %vm85, %v53, 0
    %v96 = vsel %vm85, %v54, 0
    %v99 = vsel %vm85, %v55, 0
    %v102 = vsel %vm85, %v56, 0
    %v105 = vsel %vm85, %v57, 0
    %v108 = vsel %vm85, %v58, 0
    %vm110 = vcmask 1044480
    %v112 = vsel %vm110, %v59, 0
    %v115 = vsel %vm110, %v60, 0
    %v118 = vsel %vm110, %v61, 0
    %v121 = vsel %vm110, %v62, 0
    %123 = vmatprep.subr.mxu0 0.0
    %124 = vmatpush1.msra.mxu0 0.0
    %125 = vmatprep.subr.mxu0 0.0
    %126 = vmatpush1.msra.mxu0 0.0
    %127 = vmatprep.subr.mxu0 0.0
    %128 = vmatpush1.msra.mxu0 0.0
    %129 = vmatprep.subr.mxu0 0.0
    %130 = vmatpush1.msra.mxu0 0.0
    %131 = vmatprep.subr.mxu0 0.0
    %132 = vmatpush1.msra.mxu0 0.0
    %133 = vmatprep.subr.mxu0 0.0
    %134 = vmatpush1.msra.mxu0 0.0
    %135 = vmatprep.subr.mxu0 0.0
    %136 = vmatpush1.msra.mxu0 0.0
    %137 = vmatprep.subr.mxu0 0.0
    %138 = vmatpush1.msra.mxu0 0.0
    %139 = vmatprep.subr.mxu0 0.0
    %140 = vmatpush1.msra.mxu0 0.0
    %141 = vmatprep.subr.mxu0 0.0
    %142 = vmatpush1.msra.mxu0 0.0
    %143 = vmatprep.subr.mxu0 0.0
    %144 = vmatpush1.msra.mxu0 0.0
    %145 = vmatprep.subr.mxu0 0.0
    %146 = vmatpush1.msra.mxu0 0.0
    %147 = vmatprep.subr.mxu0 0.0
    %148 = vmatpush1.msra.mxu0 0.0
    %149 = vmatprep.subr.mxu0 0.0
    %150 = vmatpush1.msra.mxu0 0.0
    %151 = vmatprep.subr.mxu0 0.0
    %152 = vmatpush1.msra.mxu0 0.0
    %153 = vmatprep.subr.mxu0 %v115
    %154 = vmatpush1.msra.mxu0 %v112
    %155 = vmatprep.subr.mxu0 0.0
    %156 = vmatpush2.msra.mxu0 0.0
    %157 = vmatprep.subr.mxu0 0.0
    %158 = vmatpush2.msra.mxu0 0.0
    %159 = vmatprep.subr.mxu0 0.0
    %160 = vmatpush2.msra.mxu0 0.0
    %161 = vmatprep.subr.mxu0 0.0
    %162 = vmatpush2.msra.mxu0 0.0
    %163 = vmatprep.subr.mxu0 0.0
    %164 = vmatpush2.msra.mxu0 0.0
    %165 = vmatprep.subr.mxu0 0.0
    %166 = vmatpush2.msra.mxu0 0.0
    %167 = vmatprep.subr.mxu0 0.0
    %168 = vmatpush2.msra.mxu0 0.0
    %169 = vmatprep.subr.mxu0 0.0
    %170 = vmatpush2.msra.mxu0 0.0
    %171 = vmatprep.subr.mxu0 0.0
    %172 = vmatpush2.msra.mxu0 0.0
    %173 = vmatprep.subr.mxu0 0.0
    %174 = vmatpush2.msra.mxu0 0.0
    %175 = vmatprep.subr.mxu0 0.0
    %176 = vmatpush2.msra.mxu0 0.0
    %177 = vmatprep.subr.mxu0 0.0
    %178 = vmatpush2.msra.mxu0 0.0
    %179 = vmatprep.subr.mxu0 0.0
    %180 = vmatpush2.msra.mxu0 0.0
    %181 = vmatprep.subr.mxu0 0.0
    %182 = vmatpush2.msra.mxu0 0.0
    %183 = vmatprep.subr.mxu0 0.0
    %184 = vmatpush2.msra.mxu0 0.0
    %185 = vmatprep.subr.mxu0 0.0
    %186 = vmatpush2.msra.mxu0 0.0
    %187 = vmatprep.mubr.f32.mxu0 0.0
    %188 = vmatmul.mubr.f32.gmra.mxu0 %v87
    %v189 = vpop.f32.mrf.mxu0
    %v190 = vadd.f32 %v68, %v189
    %v191 = vpop.f32.mrf.mxu0
    %v192 = vadd.f32 %v72, %v191
    %193 = vmatprep.mubr.f32.mxu0 0.0
    %194 = vmatmul.mubr.f32.gmra.mxu0 %v90
    %v195 = vpop.f32.mrf.mxu0
    %v196 = vadd.f32 %v68, %v195
    %v197 = vpop.f32.mrf.mxu0
    %v198 = vadd.f32 %v72, %v197
    %199 = vmatprep.mubr.f32.mxu0 0.0
    %200 = vmatmul.mubr.f32.gmra.mxu0 %v93
    %v201 = vpop.f32.mrf.mxu0
    %v202 = vadd.f32 %v68, %v201
    %v203 = vpop.f32.mrf.mxu0
    %v204 = vadd.f32 %v72, %v203
    %205 = vmatprep.mubr.f32.mxu0 0.0
    %206 = vmatmul.mubr.f32.gmra.mxu0 %v96
    %v207 = vpop.f32.mrf.mxu0
    %v208 = vadd.f32 %v68, %v207
    %v209 = vpop.f32.mrf.mxu0
    %v210 = vadd.f32 %v72, %v209
    %211 = vmatprep.mubr.f32.mxu0 0.0
    %212 = vmatmul.mubr.f32.gmra.mxu0 %v99
    %v213 = vpop.f32.mrf.mxu0
    %v214 = vadd.f32 %v68, %v213
    %v215 = vpop.f32.mrf.mxu0
    %v216 = vadd.f32 %v72, %v215
    %217 = vmatprep.mubr.f32.mxu0 0.0
    %218 = vmatmul.mubr.f32.gmra.mxu0 %v102
    %v219 = vpop.f32.mrf.mxu0
    %v220 = vadd.f32 %v68, %v219
    %v221 = vpop.f32.mrf.mxu0
    %v222 = vadd.f32 %v72, %v221
    %223 = vmatprep.mubr.f32.mxu0 0.0
    %224 = vmatmul.mubr.f32.gmra.mxu0 %v105
    %v225 = vpop.f32.mrf.mxu0
    %v226 = vadd.f32 %v68, %v225
    %v227 = vpop.f32.mrf.mxu0
    %v228 = vadd.f32 %v72, %v227
    %229 = vmatprep.mubr.f32.mxu0 0.0
    %230 = vmatmul.mubr.f32.gmra.mxu0 %v108
    %v231 = vpop.f32.mrf.mxu0
    %v232 = vadd.f32 %v68, %v231
    %v233 = vpop.f32.mrf.mxu0
    %v234 = vadd.f32 %v72, %v233
    %235 = vdwg.mxu0
    %236 = vmatprep.subr.mxu0 0.0
    %237 = vmatpush1.msra.mxu0 0.0
    %238 = vmatprep.subr.mxu0 0.0
    %239 = vmatpush1.msra.mxu0 0.0
    %240 = vmatprep.subr.mxu0 0.0
    %241 = vmatpush1.msra.mxu0 0.0
    %242 = vmatprep.subr.mxu0 0.0
    %243 = vmatpush1.msra.mxu0 0.0
    %244 = vmatprep.subr.mxu0 0.0
    %245 = vmatpush1.msra.mxu0 0.0
    %246 = vmatprep.subr.mxu0 0.0
    %247 = vmatpush1.msra.mxu0 0.0
    %248 = vmatprep.subr.mxu0 0.0
    %249 = vmatpush1.msra.mxu0 0.0
    %250 = vmatprep.subr.mxu0 0.0
    %251 = vmatpush1.msra.mxu0 0.0
    %252 = vmatprep.subr.mxu0 0.0
    %253 = vmatpush1.msra.mxu0 0.0
    %254 = vmatprep.subr.mxu0 0.0
    %255 = vmatpush1.msra.mxu0 0.0
    %256 = vmatprep.subr.mxu0 0.0
    %257 = vmatpush1.msra.mxu0 0.0
    %258 = vmatprep.subr.mxu0 0.0
    %259 = vmatpush1.msra.mxu0 0.0
    %260 = vmatprep.subr.mxu0 0.0
    %261 = vmatpush1.msra.mxu0 0.0
    %262 = vmatprep.subr.mxu0 0.0
    %263 = vmatpush1.msra.mxu0 0.0
    %264 = vmatprep.subr.mxu0 0.0
    %265 = vmatpush1.msra.mxu0 0.0
    %266 = vmatprep.subr.mxu0 %v121
    %267 = vmatpush1.msra.mxu0 %v118
    %268 = vmatprep.subr.mxu0 0.0
    %269 = vmatpush2.msra.mxu0 0.0
    %270 = vmatprep.subr.mxu0 0.0
    %271 = vmatpush2.msra.mxu0 0.0
    %272 = vmatprep.subr.mxu0 0.0
    %273 = vmatpush2.msra.mxu0 0.0
    %274 = vmatprep.subr.mxu0 0.0
    %275 = vmatpush2.msra.mxu0 0.0
    %276 = vmatprep.subr.mxu0 0.0
    %277 = vmatpush2.msra.mxu0 0.0
    %278 = vmatprep.subr.mxu0 0.0
    %279 = vmatpush2.msra.mxu0 0.0
    %280 = vmatprep.subr.mxu0 0.0
    %281 = vmatpush2.msra.mxu0 0.0
    %282 = vmatprep.subr.mxu0 0.0
    %283 = vmatpush2.msra.mxu0 0.0
    %284 = vmatprep.subr.mxu0 0.0
    %285 = vmatpush2.msra.mxu0 0.0
    %286 = vmatprep.subr.mxu0 0.0
    %287 = vmatpush2.msra.mxu0 0.0
    %288 = vmatprep.subr.mxu0 0.0
    %289 = vmatpush2.msra.mxu0 0.0
    %290 = vmatprep.subr.mxu0 0.0
    %291 = vmatpush2.msra.mxu0 0.0
    %292 = vmatprep.subr.mxu0 0.0
    %293 = vmatpush2.msra.mxu0 0.0
    %294 = vmatprep.subr.mxu0 0.0
    %295 = vmatpush2.msra.mxu0 0.0
    %296 = vmatprep.subr.mxu0 0.0
    %297 = vmatpush2.msra.mxu0 0.0
    %298 = vmatprep.subr.mxu0 0.0
    %299 = vmatpush2.msra.mxu0 0.0
    %300 = vmatprep.mubr.f32.mxu0 0.0
    %301 = vmatmul.mubr.f32.gmra.mxu0 %v87
    %v302 = vpop.f32.mrf.mxu0
    %v303 = vadd.f32 %v76, %v302
    %v304 = vpop.f32.mrf.mxu0
    %v305 = vadd.f32 %v80, %v304
    %306 = vmatprep.mubr.f32.mxu0 0.0
    %307 = vmatmul.mubr.f32.gmra.mxu0 %v90
    %v308 = vpop.f32.mrf.mxu0
    %v309 = vadd.f32 %v76, %v308
    %v310 = vpop.f32.mrf.mxu0
    %v311 = vadd.f32 %v80, %v310
    %312 = vmatprep.mubr.f32.mxu0 0.0
    %313 = vmatmul.mubr.f32.gmra.mxu0 %v93
    %v314 = vpop.f32.mrf.mxu0
    %v315 = vadd.f32 %v76, %v314
    %v316 = vpop.f32.mrf.mxu0
    %v317 = vadd.f32 %v80, %v316
    %318 = vmatprep.mubr.f32.mxu0 0.0
    %319 = vmatmul.mubr.f32.gmra.mxu0 %v96
    %v320 = vpop.f32.mrf.mxu0
    %v321 = vadd.f32 %v76, %v320
    %v322 = vpop.f32.mrf.mxu0
    %v323 = vadd.f32 %v80, %v322
    %324 = vmatprep.mubr.f32.mxu0 0.0
    %325 = vmatmul.mubr.f32.gmra.mxu0 %v99
    %v326 = vpop.f32.mrf.mxu0
    %v327 = vadd.f32 %v76, %v326
    %v328 = vpop.f32.mrf.mxu0
    %v329 = vadd.f32 %v80, %v328
    %330 = vmatprep.mubr.f32.mxu0 0.0
    %331 = vmatmul.mubr.f32.gmra.mxu0 %v102
    %v332 = vpop.f32.mrf.mxu0
    %v333 = vadd.f32 %v76, %v332
    %v334 = vpop.f32.mrf.mxu0
    %v335 = vadd.f32 %v80, %v334
    %336 = vmatprep.mubr.f32.mxu0 0.0
    %337 = vmatmul.mubr.f32.gmra.mxu0 %v105
    %v338 = vpop.f32.mrf.mxu0
    %v339 = vadd.f32 %v76, %v338
    %v340 = vpop.f32.mrf.mxu0
    %v341 = vadd.f32 %v80, %v340
    %342 = vmatprep.mubr.f32.mxu0 0.0
    %343 = vmatmul.mubr.f32.gmra.mxu0 %v108
    %v344 = vpop.f32.mrf.mxu0
    %v345 = vadd.f32 %v76, %v344
    %v346 = vpop.f32.mrf.mxu0
    %v347 = vadd.f32 %v80, %v346
    %348 = vdwg.mxu0
    %349 = vst [vmem:[#allocation2] sm:$0xff] %v190
    %350 = vst [vmem:[#allocation2 + $0x8] sm:$0xff] %v192
    %351 = vst [vmem:[#allocation2 + $0x10] sm:$0xff] %v303
    %352 = vst [vmem:[#allocation2 + $0x18] sm:$0xff] %v305
    %353 = vst [vmem:[#allocation2 + $0x20] sm:$0xff] %v196
    %354 = vst [vmem:[#allocation2 + $0x28] sm:$0xff] %v198
    %355 = vst [vmem:[#allocation2 + $0x30] sm:$0xff] %v309
    %356 = vst [vmem:[#allocation2 + $0x38] sm:$0xff] %v311
    %357 = vst [vmem:[#allocation2 + $0x40] sm:$0xff] %v202
    %358 = vst [vmem:[#allocation2 + $0x48] sm:$0xff] %v204
    %359 = vst [vmem:[#allocation2 + $0x50] sm:$0xff] %v315
    %360 = vst [vmem:[#allocation2 + $0x58] sm:$0xff] %v317
    %361 = vst [vmem:[#allocation2 + $0x60] sm:$0xff] %v208
    %362 = vst [vmem:[#allocation2 + $0x68] sm:$0xff] %v210
    %363 = vst [vmem:[#allocation2 + $0x70] sm:$0xff] %v321
    %364 = vst [vmem:[#allocation2 + $0x78] sm:$0xff] %v323
    %365 = vst [vmem:[#allocation2 + $0x80] sm:$0xff] %v214
    %366 = vst [vmem:[#allocation2 + $0x88] sm:$0xff] %v216
    %367 = vst [vmem:[#allocation2 + $0x90] sm:$0xff] %v327
    %368 = vst [vmem:[#allocation2 + $0x98] sm:$0xff] %v329
    %369 = vst [vmem:[#allocation2 + $0xa0] sm:$0xff] %v220
    %370 = vst [vmem:[#allocation2 + $0xa8] sm:$0xff] %v222
    %371 = vst [vmem:[#allocation2 + $0xb0] sm:$0xff] %v333
    %372 = vst [vmem:[#allocation2 + $0xb8] sm:$0xff] %v335
    %373 = vst [vmem:[#allocation2 + $0xc0] sm:$0xff] %v226
    %374 = vst [vmem:[#allocation2 + $0xc8] sm:$0xff] %v228
    %375 = vst [vmem:[#allocation2 + $0xd0] sm:$0xff] %v339
    %376 = vst [vmem:[#allocation2 + $0xd8] sm:$0xff] %v341
    %377 = vst [vmem:[#allocation2 + $0xe0] sm:$0xff] %v232
    %378 = vst [vmem:[#allocation2 + $0xe8] sm:$0xff] %v234
    %379 = vst [vmem:[#allocation2 + $0xf0] sm:$0xff] %v345
    %380 = vst [vmem:[#allocation2 + $0xf8] sm:$0xff] %v347
    %v381 = vld [vmem:[#allocation2] sm:$0xff]
    %v382 = vld [vmem:[#allocation2 + $0x8] sm:$0xff]
    %v383 = vld [vmem:[#allocation2 + $0x10] sm:$0xff]
    %v384 = vld [vmem:[#allocation2 + $0x18] sm:$0xff]
    %v385 = vld [vmem:[#allocation3] sm:$0xff]
    %v386 = vld [vmem:[#allocation3 + $0x8] sm:$0xff]
    %v387 = vld [vmem:[#allocation3 + $0x10] sm:$0xff]
    %v388 = vld [vmem:[#allocation3 + $0x18] sm:$0xff]
    %v389 = vld [vmem:[#allocation3 + $0x20] sm:$0xff]
    %v390 = vld [vmem:[#allocation3 + $0x28] sm:$0xff]
    %v391 = vld [vmem:[#allocation3 + $0x30] sm:$0xff]
    %v392 = vld [vmem:[#allocation3 + $0x38] sm:$0xff]
    %v393 = vld [vmem:[#allocation3 + $0x40] sm:$0xff]
    %v394 = vld [vmem:[#allocation3 + $0x48] sm:$0xff]
    %v395 = vld [vmem:[#allocation3 + $0x50] sm:$0xff]
    %v396 = vld [vmem:[#allocation3 + $0x58] sm:$0xff]
    %v397 = vld [vmem:[#allocation3 + $0x60] sm:$0xff]
    %v398 = vld [vmem:[#allocation3 + $0x68] sm:$0xff]
    %v399 = vld [vmem:[#allocation3 + $0x70] sm:$0xff]
    %v400 = vld [vmem:[#allocation3 + $0x78] sm:$0xff]
    %v401 = vld [vmem:[#allocation3 + $0x80] sm:$0xff]
    %v402 = vld [vmem:[#allocation3 + $0x88] sm:$0xff]
    %v403 = vld [vmem:[#allocation3 + $0x90] sm:$0xff]
    %v404 = vld [vmem:[#allocation3 + $0x98] sm:$0xff]
    %v405 = vld [vmem:[#allocation3 + $0xa0] sm:$0xff]
    %v406 = vld [vmem:[#allocation3 + $0xa8] sm:$0xff]
    %v407 = vld [vmem:[#allocation3 + $0xb0] sm:$0xff]
    %v408 = vld [vmem:[#allocation3 + $0xb8] sm:$0xff]
    %v409 = vld [vmem:[#allocation3 + $0xc0] sm:$0xff]
    %v410 = vld [vmem:[#allocation3 + $0xc8] sm:$0xff]
    %v411 = vld [vmem:[#allocation3 + $0xd0] sm:$0xff]
    %v412 = vld [vmem:[#allocation3 + $0xd8] sm:$0xff]
    %v413 = vld [vmem:[#allocation3 + $0xe0] sm:$0xff]
    %v414 = vld [vmem:[#allocation3 + $0xe8] sm:$0xff]
    %v415 = vld [vmem:[#allocation3 + $0xf0] sm:$0xff]
    %v416 = vld [vmem:[#allocation3 + $0xf8] sm:$0xff]
    %v417 = vld [vmem:[#allocation3 + $0x100] sm:$0xff]
    %v418 = vld [vmem:[#allocation3 + $0x108] sm:$0xff]
    %v419 = vld [vmem:[#allocation3 + $0x110] sm:$0xff]
    %v420 = vld [vmem:[#allocation3 + $0x118] sm:$0xff]
    %v421 = vld [vmem:[#allocation3 + $0x120] sm:$0xff]
    %v422 = vld [vmem:[#allocation3 + $0x128] sm:$0xff]
    %v423 = vld [vmem:[#allocation3 + $0x130] sm:$0xff]
    %v424 = vld [vmem:[#allocation3 + $0x138] sm:$0xff]
    %v425 = vld [vmem:[#allocation3 + $0x140] sm:$0xff]
    %v426 = vld [vmem:[#allocation3 + $0x148] sm:$0xff]
    %v427 = vld [vmem:[#allocation3 + $0x150] sm:$0xff]
    %v428 = vld [vmem:[#allocation3 + $0x158] sm:$0xff]
    %v429 = vld [vmem:[#allocation3 + $0x160] sm:$0xff]
    %v430 = vld [vmem:[#allocation3 + $0x168] sm:$0xff]
    %v431 = vld [vmem:[#allocation3 + $0x170] sm:$0xff]
    %v432 = vld [vmem:[#allocation3 + $0x178] sm:$0xff]
    %v433 = vld [vmem:[#allocation3 + $0x180] sm:$0xff]
    %v434 = vld [vmem:[#allocation3 + $0x188] sm:$0xff]
    %v435 = vld [vmem:[#allocation3 + $0x190] sm:$0xff]
    %v436 = vld [vmem:[#allocation3 + $0x198] sm:$0xff]
    %v437 = vld [vmem:[#allocation3 + $0x1a0] sm:$0xff]
    %v438 = vld [vmem:[#allocation3 + $0x1a8] sm:$0xff]
    %v439 = vld [vmem:[#allocation3 + $0x1b0] sm:$0xff]
    %v440 = vld [vmem:[#allocation3 + $0x1b8] sm:$0xff]
    %v441 = vld [vmem:[#allocation3 + $0x1c0] sm:$0xff]
    %v442 = vld [vmem:[#allocation3 + $0x1c8] sm:$0xff]
    %v443 = vld [vmem:[#allocation3 + $0x1d0] sm:$0xff]
    %v444 = vld [vmem:[#allocation3 + $0x1d8] sm:$0xff]
    %v445 = vld [vmem:[#allocation3 + $0x1e0] sm:$0xff]
    %v446 = vld [vmem:[#allocation3 + $0x1e8] sm:$0xff]
    %v447 = vld [vmem:[#allocation3 + $0x1f0] sm:$0xff]
    %v448 = vld [vmem:[#allocation3 + $0x1f8] sm:$0xff]
    %449 = vmatprep.subr.mxu0 %v446
    %450 = vmatpush1.msra.mxu0 %v445
    %451 = vmatprep.subr.mxu0 %v442
    %452 = vmatpush1.msra.mxu0 %v441
    %453 = vmatprep.subr.mxu0 %v438
    %454 = vmatpush1.msra.mxu0 %v437
    %455 = vmatprep.subr.mxu0 %v434
    %456 = vmatpush1.msra.mxu0 %v433
    %457 = vmatprep.subr.mxu0 %v430
    %458 = vmatpush1.msra.mxu0 %v429
    %459 = vmatprep.subr.mxu0 %v426
    %460 = vmatpush1.msra.mxu0 %v425
    %461 = vmatprep.subr.mxu0 %v422
    %462 = vmatpush1.msra.mxu0 %v421
    %463 = vmatprep.subr.mxu0 %v418
    %464 = vmatpush1.msra.mxu0 %v417
    %465 = vmatprep.subr.mxu0 %v414
    %466 = vmatpush1.msra.mxu0 %v413
    %467 = vmatprep.subr.mxu0 %v410
    %468 = vmatpush1.msra.mxu0 %v409
    %469 = vmatprep.subr.mxu0 %v406
    %470 = vmatpush1.msra.mxu0 %v405
    %471 = vmatprep.subr.mxu0 %v402
    %472 = vmatpush1.msra.mxu0 %v401
    %473 = vmatprep.subr.mxu0 %v398
    %474 = vmatpush1.msra.mxu0 %v397
    %475 = vmatprep.subr.mxu0 %v394
    %476 = vmatpush1.msra.mxu0 %v393
    %477 = vmatprep.subr.mxu0 %v390
    %478 = vmatpush1.msra.mxu0 %v389
    %479 = vmatprep.subr.mxu0 %v386
    %480 = vmatpush1.msra.mxu0 %v385
    %481 = vmatprep.subr.mxu0 0.0
    %482 = vmatpush2.msra.mxu0 0.0
    %483 = vmatprep.subr.mxu0 0.0
    %484 = vmatpush2.msra.mxu0 0.0
    %485 = vmatprep.subr.mxu0 0.0
    %486 = vmatpush2.msra.mxu0 0.0
    %487 = vmatprep.subr.mxu0 0.0
    %488 = vmatpush2.msra.mxu0 0.0
    %489 = vmatprep.subr.mxu0 0.0
    %490 = vmatpush2.msra.mxu0 0.0
    %491 = vmatprep.subr.mxu0 0.0
    %492 = vmatpush2.msra.mxu0 0.0
    %493 = vmatprep.subr.mxu0 0.0
    %494 = vmatpush2.msra.mxu0 0.0
    %495 = vmatprep.subr.mxu0 0.0
    %496 = vmatpush2.msra.mxu0 0.0
    %497 = vmatprep.subr.mxu0 0.0
    %498 = vmatpush2.msra.mxu0 0.0
    %499 = vmatprep.subr.mxu0 0.0
    %500 = vmatpush2.msra.mxu0 0.0
    %501 = vmatprep.subr.mxu0 0.0
    %502 = vmatpush2.msra.mxu0 0.0
    %503 = vmatprep.subr.mxu0 0.0
    %504 = vmatpush2.msra.mxu0 0.0
    %505 = vmatprep.subr.mxu0 0.0
    %506 = vmatpush2.msra.mxu0 0.0
    %507 = vmatprep.subr.mxu0 0.0
    %508 = vmatpush2.msra.mxu0 0.0
    %509 = vmatprep.subr.mxu0 0.0
    %510 = vmatpush2.msra.mxu0 0.0
    %511 = vmatprep.subr.mxu0 0.0
    %512 = vmatpush2.msra.mxu0 0.0
    %513 = vmatprep.mubr.f32.mxu0 0.0
    %514 = vmatmul.mubr.f32.gmra.mxu0 0.0
    %v515 = vpop.f32.mrf.mxu0
    %v516 = vadd.f32 0.0, %v515
    %v517 = vpop.f32.mrf.mxu0
    %v518 = vadd.f32 0.0, %v517
    %519 = vdwg.mxu0
    %520 = vmatprep.subr.mxu0 %v448
    %521 = vmatpush1.msra.mxu0 %v447
    %522 = vmatprep.subr.mxu0 %v444
    %523 = vmatpush1.msra.mxu0 %v443
    %524 = vmatprep.subr.mxu0 %v440
    %525 = vmatpush1.msra.mxu0 %v439
    %526 = vmatprep.subr.mxu0 %v436
    %527 = vmatpush1.msra.mxu0 %v435
    %528 = vmatprep.subr.mxu0 %v432
    %529 = vmatpush1.msra.mxu0 %v431
    %530 = vmatprep.subr.mxu0 %v428
    %531 = vmatpush1.msra.mxu0 %v427
    %532 = vmatprep.subr.mxu0 %v424
    %533 = vmatpush1.msra.mxu0 %v423
    %534 = vmatprep.subr.mxu0 %v420
    %535 = vmatpush1.msra.mxu0 %v419
    %536 = vmatprep.subr.mxu0 %v416
    %537 = vmatpush1.msra.mxu0 %v415
    %538 = vmatprep.subr.mxu0 %v412
    %539 = vmatpush1.msra.mxu0 %v411
    %540 = vmatprep.subr.mxu0 %v408
    %541 = vmatpush1.msra.mxu0 %v407
    %542 = vmatprep.subr.mxu0 %v404
    %543 = vmatpush1.msra.mxu0 %v403
    %544 = vmatprep.subr.mxu0 %v400
    %545 = vmatpush1.msra.mxu0 %v399
    %546 = vmatprep.subr.mxu0 %v396
    %547 = vmatpush1.msra.mxu0 %v395
    %548 = vmatprep.subr.mxu0 %v392
    %549 = vmatpush1.msra.mxu0 %v391
    %550 = vmatprep.subr.mxu0 %v388
    %551 = vmatpush1.msra.mxu0 %v387
    %552 = vmatprep.subr.mxu0 0.0
    %553 = vmatpush2.msra.mxu0 0.0
    %554 = vmatprep.subr.mxu0 0.0
    %555 = vmatpush2.msra.mxu0 0.0
    %556 = vmatprep.subr.mxu0 0.0
    %557 = vmatpush2.msra.mxu0 0.0
    %558 = vmatprep.subr.mxu0 0.0
    %559 = vmatpush2.msra.mxu0 0.0
    %560 = vmatprep.subr.mxu0 0.0
    %561 = vmatpush2.msra.mxu0 0.0
    %562 = vmatprep.subr.mxu0 0.0
    %563 = vmatpush2.msra.mxu0 0.0
    %564 = vmatprep.subr.mxu0 0.0
    %565 = vmatpush2.msra.mxu0 0.0
    %566 = vmatprep.subr.mxu0 0.0
    %567 = vmatpush2.msra.mxu0 0.0
    %568 = vmatprep.subr.mxu0 0.0
    %569 = vmatpush2.msra.mxu0 0.0
    %570 = vmatprep.subr.mxu0 0.0
    %571 = vmatpush2.msra.mxu0 0.0
    %572 = vmatprep.subr.mxu0 0.0
    %573 = vmatpush2.msra.mxu0 0.0
    %574 = vmatprep.subr.mxu0 0.0
    %575 = vmatpush2.msra.mxu0 0.0
    %576 = vmatprep.subr.mxu0 0.0
    %577 = vmatpush2.msra.mxu0 0.0
    %578 = vmatprep.subr.mxu0 0.0
    %579 = vmatpush2.msra.mxu0 0.0
    %580 = vmatprep.subr.mxu0 0.0
    %581 = vmatpush2.msra.mxu0 0.0
    %582 = vmatprep.subr.mxu0 0.0
    %583 = vmatpush2.msra.mxu0 0.0
    %584 = vmatprep.mubr.f32.mxu0 0.0
    %585 = vmatmul.mubr.f32.gmra.mxu0 0.0
    %v586 = vpop.f32.mrf.mxu0
    %v587 = vadd.f32 0.0, %v586
    %v588 = vpop.f32.mrf.mxu0
    %v589 = vadd.f32 0.0, %v588
    %590 = vdwg.mxu0
    %v591 = vadd.f32 %v381, %v516
    %v592 = vadd.f32 %v382, %v518
    %v593 = vadd.f32 %v383, %v587
    %v594 = vadd.f32 %v384, %v589
    %v595 = vxor.u32 %v591, 2147483648
    %v596 = vmul.f32 %v595, 1.442695
    %v597 = vpow.pop %v596
    %v598 = vadd.f32 %v597, 1.0
    %v599 = vrcp.pop %v598
    %v600 = vmul.f32 1.0, %v599
    %v601 = vxor.u32 %v592, 2147483648
    %v602 = vmul.f32 %v601, 1.442695
    %v603 = vpow.pop %v602
    %v604 = vadd.f32 %v603, 1.0
    %v605 = vrcp.pop %v604
    %v606 = vmul.f32 1.0, %v605
    %v607 = vtanh.pop %v593
    %v608 = vxor.u32 %v594, 2147483648
    %v609 = vmul.f32 %v608, 1.442695
    %v610 = vpow.pop %v609
    %v611 = vadd.f32 %v610, 1.0
    %v612 = vrcp.pop %v611
    %v613 = vmul.f32 1.0, %v612
    %v614 = vmul.f32 %v606, 0.0
    %v615 = vmul.f32 %v600, %v607
    %v616 = vadd.f32 %v614, %v615
    %v617 = vtanh.pop %v616
    %v618 = vmul.f32 %v613, %v617
    %v619 = vld [vmem:[#allocation2 + $0x20] sm:$0xff]
    %v620 = vld [vmem:[#allocation2 + $0x28] sm:$0xff]
    %v621 = vld [vmem:[#allocation2 + $0x30] sm:$0xff]
    %v622 = vld [vmem:[#allocation2 + $0x38] sm:$0xff]
    %623 = vmatprep.subr.mxu0 %v446
    %624 = vmatpush1.msra.mxu0 %v445
    %625 = vmatprep.subr.mxu0 %v442
    %626 = vmatpush1.msra.mxu0 %v441
    %627 = vmatprep.subr.mxu0 %v438
    %628 = vmatpush1.msra.mxu0 %v437
    %629 = vmatprep.subr.mxu0 %v434
    %630 = vmatpush1.msra.mxu0 %v433
    %631 = vmatprep.subr.mxu0 %v430
    %632 = vmatpush1.msra.mxu0 %v429
    %633 = vmatprep.subr.mxu0 %v426
    %634 = vmatpush1.msra.mxu0 %v425
    %635 = vmatprep.subr.mxu0 %v422
    %636 = vmatpush1.msra.mxu0 %v421
    %637 = vmatprep.subr.mxu0 %v418
    %638 = vmatpush1.msra.mxu0 %v417
    %639 = vmatprep.subr.mxu0 %v414
    %640 = vmatpush1.msra.mxu0 %v413
    %641 = vmatprep.subr.mxu0 %v410
    %642 = vmatpush1.msra.mxu0 %v409
    %643 = vmatprep.subr.mxu0 %v406
    %644 = vmatpush1.msra.mxu0 %v405
    %645 = vmatprep.subr.mxu0 %v402
    %646 = vmatpush1.msra.mxu0 %v401
    %647 = vmatprep.subr.mxu0 %v398
    %648 = vmatpush1.msra.mxu0 %v397
    %649 = vmatprep.subr.mxu0 %v394
    %650 = vmatpush1.msra.mxu0 %v393
    %651 = vmatprep.subr.mxu0 %v390
    %652 = vmatpush1.msra.mxu0 %v389
    %653 = vmatprep.subr.mxu0 %v386
    %654 = vmatpush1.msra.mxu0 %v385
    %655 = vmatprep.subr.mxu0 0.0
    %656 = vmatpush2.msra.mxu0 0.0
    %657 = vmatprep.subr.mxu0 0.0
    %658 = vmatpush2.msra.mxu0 0.0
    %659 = vmatprep.subr.mxu0 0.0
    %660 = vmatpush2.msra.mxu0 0.0
    %661 = vmatprep.subr.mxu0 0.0
    %662 = vmatpush2.msra.mxu0 0.0
    %663 = vmatprep.subr.mxu0 0.0
    %664 = vmatpush2.msra.mxu0 0.0
    %665 = vmatprep.subr.mxu0 0.0
    %666 = vmatpush2.msra.mxu0 0.0
    %667 = vmatprep.subr.mxu0 0.0
    %668 = vmatpush2.msra.mxu0 0.0
    %669 = vmatprep.subr.mxu0 0.0
    %670 = vmatpush2.msra.mxu0 0.0
    %671 = vmatprep.subr.mxu0 0.0
    %672 = vmatpush2.msra.mxu0 0.0
    %673 = vmatprep.subr.mxu0 0.0
    %674 = vmatpush2.msra.mxu0 0.0
    %675 = vmatprep.subr.mxu0 0.0
    %676 = vmatpush2.msra.mxu0 0.0
    %677 = vmatprep.subr.mxu0 0.0
    %678 = vmatpush2.msra.mxu0 0.0
    %679 = vmatprep.subr.mxu0 0.0
    %680 = vmatpush2.msra.mxu0 0.0
    %681 = vmatprep.subr.mxu0 0.0
    %682 = vmatpush2.msra.mxu0 0.0
    %683 = vmatprep.subr.mxu0 0.0
    %684 = vmatpush2.msra.mxu0 0.0
    %685 = vmatprep.subr.mxu0 0.0
    %686 = vmatpush2.msra.mxu0 0.0
    %687 = vmatprep.mubr.f32.mxu0 0.0
    %688 = vmatmul.mubr.f32.gmra.mxu0 %v618
    %v689 = vpop.f32.mrf.mxu0
    %v690 = vadd.f32 0.0, %v689
    %v691 = vpop.f32.mrf.mxu0
    %v692 = vadd.f32 0.0, %v691
    %693 = vdwg.mxu0
    %694 = vmatprep.subr.mxu0 %v448
    %695 = vmatpush1.msra.mxu0 %v447
    %696 = vmatprep.subr.mxu0 %v444
    %697 = vmatpush1.msra.mxu0 %v443
    %698 = vmatprep.subr.mxu0 %v440
    %699 = vmatpush1.msra.mxu0 %v439
    %700 = vmatprep.subr.mxu0 %v436
    %701 = vmatpush1.msra.mxu0 %v435
    %702 = vmatprep.subr.mxu0 %v432
    %703 = vmatpush1.msra.mxu0 %v431
    %704 = vmatprep.subr.mxu0 %v428
    %705 = vmatpush1.msra.mxu0 %v427
    %706 = vmatprep.subr.mxu0 %v424
    %707 = vmatpush1.msra.mxu0 %v423
    %708 = vmatprep.subr.mxu0 %v420
    %709 = vmatpush1.msra.mxu0 %v419
    %710 = vmatprep.subr.mxu0 %v416
    %711 = vmatpush1.msra.mxu0 %v415
    %712 = vmatprep.subr.mxu0 %v412
    %713 = vmatpush1.msra.mxu0 %v411
    %714 = vmatprep.subr.mxu0 %v408
    %715 = vmatpush1.msra.mxu0 %v407
    %716 = vmatprep.subr.mxu0 %v404
    %717 = vmatpush1.msra.mxu0 %v403
    %718 = vmatprep.subr.mxu0 %v400
    %719 = vmatpush1.msra.mxu0 %v399
    %720 = vmatprep.subr.mxu0 %v396
    %721 = vmatpush1.msra.mxu0 %v395
    %722 = vmatprep.subr.mxu0 %v392
    %723 = vmatpush1.msra.mxu0 %v391
    %724 = vmatprep.subr.mxu0 %v388
    %725 = vmatpush1.msra.mxu0 %v387
    %726 = vmatprep.subr.mxu0 0.0
    %727 = vmatpush2.msra.mxu0 0.0
    %728 = vmatprep.subr.mxu0 0.0
    %729 = vmatpush2.msra.mxu0 0.0
    %730 = vmatprep.subr.mxu0 0.0
    %731 = vmatpush2.msra.mxu0 0.0
    %732 = vmatprep.subr.mxu0 0.0
    %733 = vmatpush2.msra.mxu0 0.0
    %734 = vmatprep.subr.mxu0 0.0
    %735 = vmatpush2.msra.mxu0 0.0
    %736 = vmatprep.subr.mxu0 0.0
    %737 = vmatpush2.msra.mxu0 0.0
    %738 = vmatprep.subr.mxu0 0.0
    %739 = vmatpush2.msra.mxu0 0.0
    %740 = vmatprep.subr.mxu0 0.0
    %741 = vmatpush2.msra.mxu0 0.0
    %742 = vmatprep.subr.mxu0 0.0
    %743 = vmatpush2.msra.mxu0 0.0
    %744 = vmatprep.subr.mxu0 0.0
    %745 = vmatpush2.msra.mxu0 0.0
    %746 = vmatprep.subr.mxu0 0.0
    %747 = vmatpush2.msra.mxu0 0.0
    %748 = vmatprep.subr.mxu0 0.0
    %749 = vmatpush2.msra.mxu0 0.0
    %750 = vmatprep.subr.mxu0 0.0
    %751 = vmatpush2.msra.mxu0 0.0
    %752 = vmatprep.subr.mxu0 0.0
    %753 = vmatpush2.msra.mxu0 0.0
    %754 = vmatprep.subr.mxu0 0.0
    %755 = vmatpush2.msra.mxu0 0.0
    %756 = vmatprep.subr.mxu0 0.0
    %757 = vmatpush2.msra.mxu0 0.0
    %758 = vmatprep.mubr.f32.mxu0 0.0
    %759 = vmatmul.mubr.f32.gmra.mxu0 %v618
    %v760 = vpop.f32.mrf.mxu0
    %v761 = vadd.f32 0.0, %v760
    %v762 = vpop.f32.mrf.mxu0
    %v763 = vadd.f32 0.0, %v762
    %764 = vdwg.mxu0
    %v765 = vadd.f32 %v619, %v690
    %v766 = vadd.f32 %v620, %v692
    %v767 = vadd.f32 %v621, %v761
    %v768 = vadd.f32 %v622, %v763
    %v769 = vxor.u32 %v765, 2147483648
    %v770 = vmul.f32 %v769, 1.442695
    %v771 = vpow.pop %v770
    %v772 = vadd.f32 %v771, 1.0
    %v773 = vrcp.pop %v772
    %v774 = vmul.f32 1.0, %v773
    %v775 = vxor.u32 %v766, 2147483648
    %v776 = vmul.f32 %v775, 1.442695
    %v777 = vpow.pop %v776
    %v778 = vadd.f32 %v777, 1.0
    %v779 = vrcp.pop %v778
    %v780 = vmul.f32 1.0, %v779
    %v781 = vtanh.pop %v767
    %v782 = vxor.u32 %v768, 2147483648
    %v783 = vmul.f32 %v782, 1.442695
    %v784 = vpow.pop %v783
    %v785 = vadd.f32 %v784, 1.0
    %v786 = vrcp.pop %v785
    %v787 = vmul.f32 1.0, %v786
    %v788 = vmul.f32 %v780, %v616
    %v789 = vmul.f32 %v774, %v781
    %v790 = vadd.f32 %v788, %v789
    %v791 = vtanh.pop %v790
    %v792 = vmul.f32 %v787, %v791
    %v793 = vld [vmem:[#allocation2 + $0x40] sm:$0xff]
    %v794 = vld [vmem:[#allocation2 + $0x48] sm:$0xff]
    %v795 = vld [vmem:[#allocation2 + $0x50] sm:$0xff]
    %v796 = vld [vmem:[#allocation2 + $0x58] sm:$0xff]
    %797 = vmatprep.subr.mxu0 %v446
    %798 = vmatpush1.msra.mxu0 %v445
    %799 = vmatprep.subr.mxu0 %v442
    %800 = vmatpush1.msra.mxu0 %v441
    %801 = vmatprep.subr.mxu0 %v438
    %802 = vmatpush1.msra.mxu0 %v437
    %803 = vmatprep.subr.mxu0 %v434
    %804 = vmatpush1.msra.mxu0 %v433
    %805 = vmatprep.subr.mxu0 %v430
    %806 = vmatpush1.msra.mxu0 %v429
    %807 = vmatprep.subr.mxu0 %v426
    %808 = vmatpush1.msra.mxu0 %v425
    %809 = vmatprep.subr.mxu0 %v422
    %810 = vmatpush1.msra.mxu0 %v421
    %811 = vmatprep.subr.mxu0 %v418
    %812 = vmatpush1.msra.mxu0 %v417
    %813 = vmatprep.subr.mxu0 %v414
    %814 = vmatpush1.msra.mxu0 %v413
    %815 = vmatprep.subr.mxu0 %v410
    %816 = vmatpush1.msra.mxu0 %v409
    %817 = vmatprep.subr.mxu0 %v406
    %818 = vmatpush1.msra.mxu0 %v405
    %819 = vmatprep.subr.mxu0 %v402
    %820 = vmatpush1.msra.mxu0 %v401
    %821 = vmatprep.subr.mxu0 %v398
    %822 = vmatpush1.msra.mxu0 %v397
    %823 = vmatprep.subr.mxu0 %v394
    %824 = vmatpush1.msra.mxu0 %v393
    %825 = vmatprep.subr.mxu0 %v390
    %826 = vmatpush1.msra.mxu0 %v389
    %827 = vmatprep.subr.mxu0 %v386
    %828 = vmatpush1.msra.mxu0 %v385
    %829 = vmatprep.subr.mxu0 0.0
    %830 = vmatpush2.msra.mxu0 0.0
    %831 = vmatprep.subr.mxu0 0.0
    %832 = vmatpush2.msra.mxu0 0.0
    %833 = vmatprep.subr.mxu0 0.0
    %834 = vmatpush2.msra.mxu0 0.0
    %835 = vmatprep.subr.mxu0 0.0
    %836 = vmatpush2.msra.mxu0 0.0
    %837 = vmatprep.subr.mxu0 0.0
    %838 = vmatpush2.msra.mxu0 0.0
    %839 = vmatprep.subr.mxu0 0.0
    %840 = vmatpush2.msra.mxu0 0.0
    %841 = vmatprep.subr.mxu0 0.0
    %842 = vmatpush2.msra.mxu0 0.0
    %843 = vmatprep.subr.mxu0 0.0
    %844 = vmatpush2.msra.mxu0 0.0
    %845 = vmatprep.subr.mxu0 0.0
    %846 = vmatpush2.msra.mxu0 0.0
    %847 = vmatprep.subr.mxu0 0.0
    %848 = vmatpush2.msra.mxu0 0.0
    %849 = vmatprep.subr.mxu0 0.0
    %850 = vmatpush2.msra.mxu0 0.0
    %851 = vmatprep.subr.mxu0 0.0
    %852 = vmatpush2.msra.mxu0 0.0
    %853 = vmatprep.subr.mxu0 0.0
    %854 = vmatpush2.msra.mxu0 0.0
    %855 = vmatprep.subr.mxu0 0.0
    %856 = vmatpush2.msra.mxu0 0.0
    %857 = vmatprep.subr.mxu0 0.0
    %858 = vmatpush2.msra.mxu0 0.0
    %859 = vmatprep.subr.mxu0 0.0
    %860 = vmatpush2.msra.mxu0 0.0
    %861 = vmatprep.mubr.f32.mxu0 0.0
    %862 = vmatmul.mubr.f32.gmra.mxu0 %v792
    %v863 = vpop.f32.mrf.mxu0
    %v864 = vadd.f32 0.0, %v863
    %v865 = vpop.f32.mrf.mxu0
    %v866 = vadd.f32 0.0, %v865
    %867 = vdwg.mxu0
    %868 = vmatprep.subr.mxu0 %v448
    %869 = vmatpush1.msra.mxu0 %v447
    %870 = vmatprep.subr.mxu0 %v444
    %871 = vmatpush1.msra.mxu0 %v443
    %872 = vmatprep.subr.mxu0 %v440
    %873 = vmatpush1.msra.mxu0 %v439
    %874 = vmatprep.subr.mxu0 %v436
    %875 = vmatpush1.msra.mxu0 %v435
    %876 = vmatprep.subr.mxu0 %v432
    %877 = vmatpush1.msra.mxu0 %v431
    %878 = vmatprep.subr.mxu0 %v428
    %879 = vmatpush1.msra.mxu0 %v427
    %880 = vmatprep.subr.mxu0 %v424
    %881 = vmatpush1.msra.mxu0 %v423
    %882 = vmatprep.subr.mxu0 %v420
    %883 = vmatpush1.msra.mxu0 %v419
    %884 = vmatprep.subr.mxu0 %v416
    %885 = vmatpush1.msra.mxu0 %v415
    %886 = vmatprep.subr.mxu0 %v412
    %887 = vmatpush1.msra.mxu0 %v411
    %888 = vmatprep.subr.mxu0 %v408
    %889 = vmatpush1.msra.mxu0 %v407
    %890 = vmatprep.subr.mxu0 %v404
    %891 = vmatpush1.msra.mxu0 %v403
    %892 = vmatprep.subr.mxu0 %v400
    %893 = vmatpush1.msra.mxu0 %v399
    %894 = vmatprep.subr.mxu0 %v396
    %895 = vmatpush1.msra.mxu0 %v395
    %896 = vmatprep.subr.mxu0 %v392
    %897 = vmatpush1.msra.mxu0 %v391
    %898 = vmatprep.subr.mxu0 %v388
    %899 = vmatpush1.msra.mxu0 %v387
    %900 = vmatprep.subr.mxu0 0.0
    %901 = vmatpush2.msra.mxu0 0.0
    %902 = vmatprep.subr.mxu0 0.0
    %903 = vmatpush2.msra.mxu0 0.0
    %904 = vmatprep.subr.mxu0 0.0
    %905 = vmatpush2.msra.mxu0 0.0
    %906 = vmatprep.subr.mxu0 0.0
    %907 = vmatpush2.msra.mxu0 0.0
    %908 = vmatprep.subr.mxu0 0.0
    %909 = vmatpush2.msra.mxu0 0.0
    %910 = vmatprep.subr.mxu0 0.0
    %911 = vmatpush2.msra.mxu0 0.0
    %912 = vmatprep.subr.mxu0 0.0
    %913 = vmatpush2.msra.mxu0 0.0
    %914 = vmatprep.subr.mxu0 0.0
    %915 = vmatpush2.msra.mxu0 0.0
    %916 = vmatprep.subr.mxu0 0.0
    %917 = vmatpush2.msra.mxu0 0.0
    %918 = vmatprep.subr.mxu0 0.0
    %919 = vmatpush2.msra.mxu0 0.0
    %920 = vmatprep.subr.mxu0 0.0
    %921 = vmatpush2.msra.mxu0 0.0
    %922 = vmatprep.subr.mxu0 0.0
    %923 = vmatpush2.msra.mxu0 0.0
    %924 = vmatprep.subr.mxu0 0.0
    %925 = vmatpush2.msra.mxu0 0.0
    %926 = vmatprep.subr.mxu0 0.0
    %927 = vmatpush2.msra.mxu0 0.0
    %928 = vmatprep.subr.mxu0 0.0
    %929 = vmatpush2.msra.mxu0 0.0
    %930 = vmatprep.subr.mxu0 0.0
    %931 = vmatpush2.msra.mxu0 0.0
    %932 = vmatprep.mubr.f32.mxu0 0.0
    %933 = vmatmul.mubr.f32.gmra.mxu0 %v792
    %v934 = vpop.f32.mrf.mxu0
    %v935 = vadd.f32 0.0, %v934
    %v936 = vpop.f32.mrf.mxu0
    %v937 = vadd.f32 0.0, %v936
    %938 = vdwg.mxu0
    %v939 = vadd.f32 %v793, %v864
    %v940 = vadd.f32 %v794, %v866
    %v941 = vadd.f32 %v795, %v935
    %v942 = vadd.f32 %v796, %v937
    %v943 = vxor.u32 %v939, 2147483648
    %v944 = vmul.f32 %v943, 1.442695
    %v945 = vpow.pop %v944
    %v946 = vadd.f32 %v945, 1.0
    %v947 = vrcp.pop %v946
    %v948 = vmul.f32 1.0, %v947
    %v949 = vxor.u32 %v940, 2147483648
    %v950 = vmul.f32 %v949, 1.442695
    %v951 = vpow.pop %v950
    %v952 = vadd.f32 %v951, 1.0
    %v953 = vrcp.pop %v952
    %v954 = vmul.f32 1.0, %v953
    %v955 = vtanh.pop %v941
    %v956 = vxor.u32 %v942, 2147483648
    %v957 = vmul.f32 %v956, 1.442695
    %v958 = vpow.pop %v957
    %v959 = vadd.f32 %v958, 1.0
    %v960 = vrcp.pop %v959
    %v961 = vmul.f32 1.0, %v960
    %v962 = vmul.f32 %v954, %v790
    %v963 = vmul.f32 %v948, %v955
    %v964 = vadd.f32 %v962, %v963
    %v965 = vtanh.pop %v964
    %v966 = vmul.f32 %v961, %v965
    %v967 = vld [vmem:[#allocation2 + $0x60] sm:$0xff]
    %v968 = vld [vmem:[#allocation2 + $0x68] sm:$0xff]
    %v969 = vld [vmem:[#allocation2 + $0x70] sm:$0xff]
    %v970 = vld [vmem:[#allocation2 + $0x78] sm:$0xff]
    %971 = vmatprep.subr.mxu0 %v446
    %972 = vmatpush1.msra.mxu0 %v445
    %973 = vmatprep.subr.mxu0 %v442
    %974 = vmatpush1.msra.mxu0 %v441
    %975 = vmatprep.subr.mxu0 %v438
    %976 = vmatpush1.msra.mxu0 %v437
    %977 = vmatprep.subr.mxu0 %v434
    %978 = vmatpush1.msra.mxu0 %v433
    %979 = vmatprep.subr.mxu0 %v430
    %980 = vmatpush1.msra.mxu0 %v429
    %981 = vmatprep.subr.mxu0 %v426
    %982 = vmatpush1.msra.mxu0 %v425
    %983 = vmatprep.subr.mxu0 %v422
    %984 = vmatpush1.msra.mxu0 %v421
    %985 = vmatprep.subr.mxu0 %v418
    %986 = vmatpush1.msra.mxu0 %v417
    %987 = vmatprep.subr.mxu0 %v414
    %988 = vmatpush1.msra.mxu0 %v413
    %989 = vmatprep.subr.mxu0 %v410
    %990 = vmatpush1.msra.mxu0 %v409
    %991 = vmatprep.subr.mxu0 %v406
    %992 = vmatpush1.msra.mxu0 %v405
    %993 = vmatprep.subr.mxu0 %v402
    %994 = vmatpush1.msra.mxu0 %v401
    %995 = vmatprep.subr.mxu0 %v398
    %996 = vmatpush1.msra.mxu0 %v397
    %997 = vmatprep.subr.mxu0 %v394
    %998 = vmatpush1.msra.mxu0 %v393
    %999 = vmatprep.subr.mxu0 %v390
    %1000 = vmatpush1.msra.mxu0 %v389
    %1001 = vmatprep.subr.mxu0 %v386
    %1002 = vmatpush1.msra.mxu0 %v385
    %1003 = vmatprep.subr.mxu0 0.0
    %1004 = vmatpush2.msra.mxu0 0.0
    %1005 = vmatprep.subr.mxu0 0.0
    %1006 = vmatpush2.msra.mxu0 0.0
    %1007 = vmatprep.subr.mxu0 0.0
    %1008 = vmatpush2.msra.mxu0 0.0
    %1009 = vmatprep.subr.mxu0 0.0
    %1010 = vmatpush2.msra.mxu0 0.0
    %1011 = vmatprep.subr.mxu0 0.0
    %1012 = vmatpush2.msra.mxu0 0.0
    %1013 = vmatprep.subr.mxu0 0.0
    %1014 = vmatpush2.msra.mxu0 0.0
    %1015 = vmatprep.subr.mxu0 0.0
    %1016 = vmatpush2.msra.mxu0 0.0
    %1017 = vmatprep.subr.mxu0 0.0
    %1018 = vmatpush2.msra.mxu0 0.0
    %1019 = vmatprep.subr.mxu0 0.0
    %1020 = vmatpush2.msra.mxu0 0.0
    %1021 = vmatprep.subr.mxu0 0.0
    %1022 = vmatpush2.msra.mxu0 0.0
    %1023 = vmatprep.subr.mxu0 0.0
    %1024 = vmatpush2.msra.mxu0 0.0
    %1025 = vmatprep.subr.mxu0 0.0
    %1026 = vmatpush2.msra.mxu0 0.0
    %1027 = vmatprep.subr.mxu0 0.0
    %1028 = vmatpush2.msra.mxu0 0.0
    %1029 = vmatprep.subr.mxu0 0.0
    %1030 = vmatpush2.msra.mxu0 0.0
    %1031 = vmatprep.subr.mxu0 0.0
    %1032 = vmatpush2.msra.mxu0 0.0
    %1033 = vmatprep.subr.mxu0 0.0
    %1034 = vmatpush2.msra.mxu0 0.0
    %1035 = vmatprep.mubr.f32.mxu0 0.0
    %1036 = vmatmul.mubr.f32.gmra.mxu0 %v966
    %v1037 = vpop.f32.mrf.mxu0
    %v1038 = vadd.f32 0.0, %v1037
    %v1039 = vpop.f32.mrf.mxu0
    %v1040 = vadd.f32 0.0, %v1039
    %1041 = vdwg.mxu0
    %1042 = vmatprep.subr.mxu0 %v448
    %1043 = vmatpush1.msra.mxu0 %v447
    %1044 = vmatprep.subr.mxu0 %v444
    %1045 = vmatpush1.msra.mxu0 %v443
    %1046 = vmatprep.subr.mxu0 %v440
    %1047 = vmatpush1.msra.mxu0 %v439
    %1048 = vmatprep.subr.mxu0 %v436
    %1049 = vmatpush1.msra.mxu0 %v435
    %1050 = vmatprep.subr.mxu0 %v432
    %1051 = vmatpush1.msra.mxu0 %v431
    %1052 = vmatprep.subr.mxu0 %v428
    %1053 = vmatpush1.msra.mxu0 %v427
    %1054 = vmatprep.subr.mxu0 %v424
    %1055 = vmatpush1.msra.mxu0 %v423
    %1056 = vmatprep.subr.mxu0 %v420
    %1057 = vmatpush1.msra.mxu0 %v419
    %1058 = vmatprep.subr.mxu0 %v416
    %1059 = vmatpush1.msra.mxu0 %v415
    %1060 = vmatprep.subr.mxu0 %v412
    %1061 = vmatpush1.msra.mxu0 %v411
    %1062 = vmatprep.subr.mxu0 %v408
    %1063 = vmatpush1.msra.mxu0 %v407
    %1064 = vmatprep.subr.mxu0 %v404
    %1065 = vmatpush1.msra.mxu0 %v403
    %1066 = vmatprep.subr.mxu0 %v400
    %1067 = vmatpush1.msra.mxu0 %v399
    %1068 = vmatprep.subr.mxu0 %v396
    %1069 = vmatpush1.msra.mxu0 %v395
    %1070 = vmatprep.subr.mxu0 %v392
    %1071 = vmatpush1.msra.mxu0 %v391
    %1072 = vmatprep.subr.mxu0 %v388
    %1073 = vmatpush1.msra.mxu0 %v387
    %1074 = vmatprep.subr.mxu0 0.0
    %1075 = vmatpush2.msra.mxu0 0.0
    %1076 = vmatprep.subr.mxu0 0.0
    %1077 = vmatpush2.msra.mxu0 0.0
    %1078 = vmatprep.subr.mxu0 0.0
    %1079 = vmatpush2.msra.mxu0 0.0
    %1080 = vmatprep.subr.mxu0 0.0
    %1081 = vmatpush2.msra.mxu0 0.0
    %1082 = vmatprep.subr.mxu0 0.0
    %1083 = vmatpush2.msra.mxu0 0.0
    %1084 = vmatprep.subr.mxu0 0.0
    %1085 = vmatpush2.msra.mxu0 0.0
    %1086 = vmatprep.subr.mxu0 0.0
    %1087 = vmatpush2.msra.mxu0 0.0
    %1088 = vmatprep.subr.mxu0 0.0
    %1089 = vmatpush2.msra.mxu0 0.0
    %1090 = vmatprep.subr.mxu0 0.0
    %1091 = vmatpush2.msra.mxu0 0.0
    %1092 = vmatprep.subr.mxu0 0.0
    %1093 = vmatpush2.msra.mxu0 0.0
    %1094 = vmatprep.subr.mxu0 0.0
    %1095 = vmatpush2.msra.mxu0 0.0
    %1096 = vmatprep.subr.mxu0 0.0
    %1097 = vmatpush2.msra.mxu0 0.0
    %1098 = vmatprep.subr.mxu0 0.0
    %1099 = vmatpush2.msra.mxu0 0.0
    %1100 = vmatprep.subr.mxu0 0.0
    %1101 = vmatpush2.msra.mxu0 0.0
    %1102 = vmatprep.subr.mxu0 0.0
    %1103 = vmatpush2.msra.mxu0 0.0
    %1104 = vmatprep.subr.mxu0 0.0
    %1105 = vmatpush2.msra.mxu0 0.0
    %1106 = vmatprep.mubr.f32.mxu0 0.0
    %1107 = vmatmul.mubr.f32.gmra.mxu0 %v966
    %v1108 = vpop.f32.mrf.mxu0
    %v1109 = vadd.f32 0.0, %v1108
    %v1110 = vpop.f32.mrf.mxu0
    %v1111 = vadd.f32 0.0, %v1110
    %1112 = vdwg.mxu0
    %v1113 = vadd.f32 %v967, %v1038
    %v1114 = vadd.f32 %v968, %v1040
    %v1115 = vadd.f32 %v969, %v1109
    %v1116 = vadd.f32 %v970, %v1111
    %v1117 = vxor.u32 %v1113, 2147483648
    %v1118 = vmul.f32 %v1117, 1.442695
    %v1119 = vpow.pop %v1118
    %v1120 = vadd.f32 %v1119, 1.0
    %v1121 = vrcp.pop %v1120
    %v1122 = vmul.f32 1.0, %v1121
    %v1123 = vxor.u32 %v1114, 2147483648
    %v1124 = vmul.f32 %v1123, 1.442695
    %v1125 = vpow.pop %v1124
    %v1126 = vadd.f32 %v1125, 1.0
    %v1127 = vrcp.pop %v1126
    %v1128 = vmul.f32 1.0, %v1127
    %v1129 = vtanh.pop %v1115
    %v1130 = vxor.u32 %v1116, 2147483648
    %v1131 = vmul.f32 %v1130, 1.442695
    %v1132 = vpow.pop %v1131
    %v1133 = vadd.f32 %v1132, 1.0
    %v1134 = vrcp.pop %v1133
    %v1135 = vmul.f32 1.0, %v1134
    %v1136 = vmul.f32 %v1128, %v964
    %v1137 = vmul.f32 %v1122, %v1129
    %v1138 = vadd.f32 %v1136, %v1137
    %v1139 = vtanh.pop %v1138
    %v1140 = vmul.f32 %v1135, %v1139
    %v1141 = vld [vmem:[#allocation2 + $0x80] sm:$0xff]
    %v1142 = vld [vmem:[#allocation2 + $0x88] sm:$0xff]
    %v1143 = vld [vmem:[#allocation2 + $0x90] sm:$0xff]
    %v1144 = vld [vmem:[#allocation2 + $0x98] sm:$0xff]
    %1145 = vmatprep.subr.mxu0 %v446
    %1146 = vmatpush1.msra.mxu0 %v445
    %1147 = vmatprep.subr.mxu0 %v442
    %1148 = vmatpush1.msra.mxu0 %v441
    %1149 = vmatprep.subr.mxu0 %v438
    %1150 = vmatpush1.msra.mxu0 %v437
    %1151 = vmatprep.subr.mxu0 %v434
    %1152 = vmatpush1.msra.mxu0 %v433
    %1153 = vmatprep.subr.mxu0 %v430
    %1154 = vmatpush1.msra.mxu0 %v429
    %1155 = vmatprep.subr.mxu0 %v426
    %1156 = vmatpush1.msra.mxu0 %v425
    %1157 = vmatprep.subr.mxu0 %v422
    %1158 = vmatpush1.msra.mxu0 %v421
    %1159 = vmatprep.subr.mxu0 %v418
    %1160 = vmatpush1.msra.mxu0 %v417
    %1161 = vmatprep.subr.mxu0 %v414
    %1162 = vmatpush1.msra.mxu0 %v413
    %1163 = vmatprep.subr.mxu0 %v410
    %1164 = vmatpush1.msra.mxu0 %v409
    %1165 = vmatprep.subr.mxu0 %v406
    %1166 = vmatpush1.msra.mxu0 %v405
    %1167 = vmatprep.subr.mxu0 %v402
    %1168 = vmatpush1.msra.mxu0 %v401
    %1169 = vmatprep.subr.mxu0 %v398
    %1170 = vmatpush1.msra.mxu0 %v397
    %1171 = vmatprep.subr.mxu0 %v394
    %1172 = vmatpush1.msra.mxu0 %v393
    %1173 = vmatprep.subr.mxu0 %v390
    %1174 = vmatpush1.msra.mxu0 %v389
    %1175 = vmatprep.subr.mxu0 %v386
    %1176 = vmatpush1.msra.mxu0 %v385
    %1177 = vmatprep.subr.mxu0 0.0
    %1178 = vmatpush2.msra.mxu0 0.0
    %1179 = vmatprep.subr.mxu0 0.0
    %1180 = vmatpush2.msra.mxu0 0.0
    %1181 = vmatprep.subr.mxu0 0.0
    %1182 = vmatpush2.msra.mxu0 0.0
    %1183 = vmatprep.subr.mxu0 0.0
    %1184 = vmatpush2.msra.mxu0 0.0
    %1185 = vmatprep.subr.mxu0 0.0
    %1186 = vmatpush2.msra.mxu0 0.0
    %1187 = vmatprep.subr.mxu0 0.0
    %1188 = vmatpush2.msra.mxu0 0.0
    %1189 = vmatprep.subr.mxu0 0.0
    %1190 = vmatpush2.msra.mxu0 0.0
    %1191 = vmatprep.subr.mxu0 0.0
    %1192 = vmatpush2.msra.mxu0 0.0
    %1193 = vmatprep.subr.mxu0 0.0
    %1194 = vmatpush2.msra.mxu0 0.0
    %1195 = vmatprep.subr.mxu0 0.0
    %1196 = vmatpush2.msra.mxu0 0.0
    %1197 = vmatprep.subr.mxu0 0.0
    %1198 = vmatpush2.msra.mxu0 0.0
    %1199 = vmatprep.subr.mxu0 0.0
    %1200 = vmatpush2.msra.mxu0 0.0
    %1201 = vmatprep.subr.mxu0 0.0
    %1202 = vmatpush2.msra.mxu0 0.0
    %1203 = vmatprep.subr.mxu0 0.0
    %1204 = vmatpush2.msra.mxu0 0.0
    %1205 = vmatprep.subr.mxu0 0.0
    %1206 = vmatpush2.msra.mxu0 0.0
    %1207 = vmatprep.subr.mxu0 0.0
    %1208 = vmatpush2.msra.mxu0 0.0
    %1209 = vmatprep.mubr.f32.mxu0 0.0
    %1210 = vmatmul.mubr.f32.gmra.mxu0 %v1140
    %v1211 = vpop.f32.mrf.mxu0
    %v1212 = vadd.f32 0.0, %v1211
    %v1213 = vpop.f32.mrf.mxu0
    %v1214 = vadd.f32 0.0, %v1213
    %1215 = vdwg.mxu0
    %1216 = vmatprep.subr.mxu0 %v448
    %1217 = vmatpush1.msra.mxu0 %v447
    %1218 = vmatprep.subr.mxu0 %v444
    %1219 = vmatpush1.msra.mxu0 %v443
    %1220 = vmatprep.subr.mxu0 %v440
    %1221 = vmatpush1.msra.mxu0 %v439
    %1222 = vmatprep.subr.mxu0 %v436
    %1223 = vmatpush1.msra.mxu0 %v435
    %1224 = vmatprep.subr.mxu0 %v432
    %1225 = vmatpush1.msra.mxu0 %v431
    %1226 = vmatprep.subr.mxu0 %v428
    %1227 = vmatpush1.msra.mxu0 %v427
    %1228 = vmatprep.subr.mxu0 %v424
    %1229 = vmatpush1.msra.mxu0 %v423
    %1230 = vmatprep.subr.mxu0 %v420
    %1231 = vmatpush1.msra.mxu0 %v419
    %1232 = vmatprep.subr.mxu0 %v416
    %1233 = vmatpush1.msra.mxu0 %v415
    %1234 = vmatprep.subr.mxu0 %v412
    %1235 = vmatpush1.msra.mxu0 %v411
    %1236 = vmatprep.subr.mxu0 %v408
    %1237 = vmatpush1.msra.mxu0 %v407
    %1238 = vmatprep.subr.mxu0 %v404
    %1239 = vmatpush1.msra.mxu0 %v403
    %1240 = vmatprep.subr.mxu0 %v400
    %1241 = vmatpush1.msra.mxu0 %v399
    %1242 = vmatprep.subr.mxu0 %v396
    %1243 = vmatpush1.msra.mxu0 %v395
    %1244 = vmatprep.subr.mxu0 %v392
    %1245 = vmatpush1.msra.mxu0 %v391
    %1246 = vmatprep.subr.mxu0 %v388
    %1247 = vmatpush1.msra.mxu0 %v387
    %1248 = vmatprep.subr.mxu0 0.0
    %1249 = vmatpush2.msra.mxu0 0.0
    %1250 = vmatprep.subr.mxu0 0.0
    %1251 = vmatpush2.msra.mxu0 0.0
    %1252 = vmatprep.subr.mxu0 0.0
    %1253 = vmatpush2.msra.mxu0 0.0
    %1254 = vmatprep.subr.mxu0 0.0
    %1255 = vmatpush2.msra.mxu0 0.0
    %1256 = vmatprep.subr.mxu0 0.0
    %1257 = vmatpush2.msra.mxu0 0.0
    %1258 = vmatprep.subr.mxu0 0.0
    %1259 = vmatpush2.msra.mxu0 0.0
    %1260 = vmatprep.subr.mxu0 0.0
    %1261 = vmatpush2.msra.mxu0 0.0
    %1262 = vmatprep.subr.mxu0 0.0
    %1263 = vmatpush2.msra.mxu0 0.0
    %1264 = vmatprep.subr.mxu0 0.0
    %1265 = vmatpush2.msra.mxu0 0.0
    %1266 = vmatprep.subr.mxu0 0.0
    %1267 = vmatpush2.msra.mxu0 0.0
    %1268 = vmatprep.subr.mxu0 0.0
    %1269 = vmatpush2.msra.mxu0 0.0
    %1270 = vmatprep.subr.mxu0 0.0
    %1271 = vmatpush2.msra.mxu0 0.0
    %1272 = vmatprep.subr.mxu0 0.0
    %1273 = vmatpush2.msra.mxu0 0.0
    %1274 = vmatprep.subr.mxu0 0.0
    %1275 = vmatpush2.msra.mxu0 0.0
    %1276 = vmatprep.subr.mxu0 0.0
    %1277 = vmatpush2.msra.mxu0 0.0
    %1278 = vmatprep.subr.mxu0 0.0
    %1279 = vmatpush2.msra.mxu0 0.0
    %1280 = vmatprep.mubr.f32.mxu0 0.0
    %1281 = vmatmul.mubr.f32.gmra.mxu0 %v1140
    %v1282 = vpop.f32.mrf.mxu0
    %v1283 = vadd.f32 0.0, %v1282
    %v1284 = vpop.f32.mrf.mxu0
    %v1285 = vadd.f32 0.0, %v1284
    %1286 = vdwg.mxu0
    %v1287 = vadd.f32 %v1141, %v1212
    %v1288 = vadd.f32 %v1142, %v1214
    %v1289 = vadd.f32 %v1143, %v1283
    %v1290 = vadd.f32 %v1144, %v1285
    %v1291 = vxor.u32 %v1287, 2147483648
    %v1292 = vmul.f32 %v1291, 1.442695
    %v1293 = vpow.pop %v1292
    %v1294 = vadd.f32 %v1293, 1.0
    %v1295 = vrcp.pop %v1294
    %v1296 = vmul.f32 1.0, %v1295
    %v1297 = vxor.u32 %v1288, 2147483648
    %v1298 = vmul.f32 %v1297, 1.442695
    %v1299 = vpow.pop %v1298
    %v1300 = vadd.f32 %v1299, 1.0
    %v1301 = vrcp.pop %v1300
    %v1302 = vmul.f32 1.0, %v1301
    %v1303 = vtanh.pop %v1289
    %v1304 = vxor.u32 %v1290, 2147483648
    %v1305 = vmul.f32 %v1304, 1.442695
    %v1306 = vpow.pop %v1305
    %v1307 = vadd.f32 %v1306, 1.0
    %v1308 = vrcp.pop %v1307
    %v1309 = vmul.f32 1.0, %v1308
    %v1310 = vmul.f32 %v1302, %v1138
    %v1311 = vmul.f32 %v1296, %v1303
    %v1312 = vadd.f32 %v1310, %v1311
    %v1313 = vtanh.pop %v1312
    %v1314 = vmul.f32 %v1309, %v1313
    %v1315 = vld [vmem:[#allocation2 + $0xa0] sm:$0xff]
    %v1316 = vld [vmem:[#allocation2 + $0xa8] sm:$0xff]
    %v1317 = vld [vmem:[#allocation2 + $0xb0] sm:$0xff]
    %v1318 = vld [vmem:[#allocation2 + $0xb8] sm:$0xff]
    %1319 = vmatprep.subr.mxu0 %v446
    %1320 = vmatpush1.msra.mxu0 %v445
    %1321 = vmatprep.subr.mxu0 %v442
    %1322 = vmatpush1.msra.mxu0 %v441
    %1323 = vmatprep.subr.mxu0 %v438
    %1324 = vmatpush1.msra.mxu0 %v437
    %1325 = vmatprep.subr.mxu0 %v434
    %1326 = vmatpush1.msra.mxu0 %v433
    %1327 = vmatprep.subr.mxu0 %v430
    %1328 = vmatpush1.msra.mxu0 %v429
    %1329 = vmatprep.subr.mxu0 %v426
    %1330 = vmatpush1.msra.mxu0 %v425
    %1331 = vmatprep.subr.mxu0 %v422
    %1332 = vmatpush1.msra.mxu0 %v421
    %1333 = vmatprep.subr.mxu0 %v418
    %1334 = vmatpush1.msra.mxu0 %v417
    %1335 = vmatprep.subr.mxu0 %v414
    %1336 = vmatpush1.msra.mxu0 %v413
    %1337 = vmatprep.subr.mxu0 %v410
    %1338 = vmatpush1.msra.mxu0 %v409
    %1339 = vmatprep.subr.mxu0 %v406
    %1340 = vmatpush1.msra.mxu0 %v405
    %1341 = vmatprep.subr.mxu0 %v402
    %1342 = vmatpush1.msra.mxu0 %v401
    %1343 = vmatprep.subr.mxu0 %v398
    %1344 = vmatpush1.msra.mxu0 %v397
    %1345 = vmatprep.subr.mxu0 %v394
    %1346 = vmatpush1.msra.mxu0 %v393
    %1347 = vmatprep.subr.mxu0 %v390
    %1348 = vmatpush1.msra.mxu0 %v389
    %1349 = vmatprep.subr.mxu0 %v386
    %1350 = vmatpush1.msra.mxu0 %v385
    %1351 = vmatprep.subr.mxu0 0.0
    %1352 = vmatpush2.msra.mxu0 0.0
    %1353 = vmatprep.subr.mxu0 0.0
    %1354 = vmatpush2.msra.mxu0 0.0
    %1355 = vmatprep.subr.mxu0 0.0
    %1356 = vmatpush2.msra.mxu0 0.0
    %1357 = vmatprep.subr.mxu0 0.0
    %1358 = vmatpush2.msra.mxu0 0.0
    %1359 = vmatprep.subr.mxu0 0.0
    %1360 = vmatpush2.msra.mxu0 0.0
    %1361 = vmatprep.subr.mxu0 0.0
    %1362 = vmatpush2.msra.mxu0 0.0
    %1363 = vmatprep.subr.mxu0 0.0
    %1364 = vmatpush2.msra.mxu0 0.0
    %1365 = vmatprep.subr.mxu0 0.0
    %1366 = vmatpush2.msra.mxu0 0.0
    %1367 = vmatprep.subr.mxu0 0.0
    %1368 = vmatpush2.msra.mxu0 0.0
    %1369 = vmatprep.subr.mxu0 0.0
    %1370 = vmatpush2.msra.mxu0 0.0
    %1371 = vmatprep.subr.mxu0 0.0
    %1372 = vmatpush2.msra.mxu0 0.0
    %1373 = vmatprep.subr.mxu0 0.0
    %1374 = vmatpush2.msra.mxu0 0.0
    %1375 = vmatprep.subr.mxu0 0.0
    %1376 = vmatpush2.msra.mxu0 0.0
    %1377 = vmatprep.subr.mxu0 0.0
    %1378 = vmatpush2.msra.mxu0 0.0
    %1379 = vmatprep.subr.mxu0 0.0
    %1380 = vmatpush2.msra.mxu0 0.0
    %1381 = vmatprep.subr.mxu0 0.0
    %1382 = vmatpush2.msra.mxu0 0.0
    %1383 = vmatprep.mubr.f32.mxu0 0.0
    %1384 = vmatmul.mubr.f32.gmra.mxu0 %v1314
    %v1385 = vpop.f32.mrf.mxu0
    %v1386 = vadd.f32 0.0, %v1385
    %v1387 = vpop.f32.mrf.mxu0
    %v1388 = vadd.f32 0.0, %v1387
    %1389 = vdwg.mxu0
    %1390 = vmatprep.subr.mxu0 %v448
    %1391 = vmatpush1.msra.mxu0 %v447
    %1392 = vmatprep.subr.mxu0 %v444
    %1393 = vmatpush1.msra.mxu0 %v443
    %1394 = vmatprep.subr.mxu0 %v440
    %1395 = vmatpush1.msra.mxu0 %v439
    %1396 = vmatprep.subr.mxu0 %v436
    %1397 = vmatpush1.msra.mxu0 %v435
    %1398 = vmatprep.subr.mxu0 %v432
    %1399 = vmatpush1.msra.mxu0 %v431
    %1400 = vmatprep.subr.mxu0 %v428
    %1401 = vmatpush1.msra.mxu0 %v427
    %1402 = vmatprep.subr.mxu0 %v424
    %1403 = vmatpush1.msra.mxu0 %v423
    %1404 = vmatprep.subr.mxu0 %v420
    %1405 = vmatpush1.msra.mxu0 %v419
    %1406 = vmatprep.subr.mxu0 %v416
    %1407 = vmatpush1.msra.mxu0 %v415
    %1408 = vmatprep.subr.mxu0 %v412
    %1409 = vmatpush1.msra.mxu0 %v411
    %1410 = vmatprep.subr.mxu0 %v408
    %1411 = vmatpush1.msra.mxu0 %v407
    %1412 = vmatprep.subr.mxu0 %v404
    %1413 = vmatpush1.msra.mxu0 %v403
    %1414 = vmatprep.subr.mxu0 %v400
    %1415 = vmatpush1.msra.mxu0 %v399
    %1416 = vmatprep.subr.mxu0 %v396
    %1417 = vmatpush1.msra.mxu0 %v395
    %1418 = vmatprep.subr.mxu0 %v392
    %1419 = vmatpush1.msra.mxu0 %v391
    %1420 = vmatprep.subr.mxu0 %v388
    %1421 = vmatpush1.msra.mxu0 %v387
    %1422 = vmatprep.subr.mxu0 0.0
    %1423 = vmatpush2.msra.mxu0 0.0
    %1424 = vmatprep.subr.mxu0 0.0
    %1425 = vmatpush2.msra.mxu0 0.0
    %1426 = vmatprep.subr.mxu0 0.0
    %1427 = vmatpush2.msra.mxu0 0.0
    %1428 = vmatprep.subr.mxu0 0.0
    %1429 = vmatpush2.msra.mxu0 0.0
    %1430 = vmatprep.subr.mxu0 0.0
    %1431 = vmatpush2.msra.mxu0 0.0
    %1432 = vmatprep.subr.mxu0 0.0
    %1433 = vmatpush2.msra.mxu0 0.0
    %1434 = vmatprep.subr.mxu0 0.0
    %1435 = vmatpush2.msra.mxu0 0.0
    %1436 = vmatprep.subr.mxu0 0.0
    %1437 = vmatpush2.msra.mxu0 0.0
    %1438 = vmatprep.subr.mxu0 0.0
    %1439 = vmatpush2.msra.mxu0 0.0
    %1440 = vmatprep.subr.mxu0 0.0
    %1441 = vmatpush2.msra.mxu0 0.0
    %1442 = vmatprep.subr.mxu0 0.0
    %1443 = vmatpush2.msra.mxu0 0.0
    %1444 = vmatprep.subr.mxu0 0.0
    %1445 = vmatpush2.msra.mxu0 0.0
    %1446 = vmatprep.subr.mxu0 0.0
    %1447 = vmatpush2.msra.mxu0 0.0
    %1448 = vmatprep.subr.mxu0 0.0
    %1449 = vmatpush2.msra.mxu0 0.0
    %1450 = vmatprep.subr.mxu0 0.0
    %1451 = vmatpush2.msra.mxu0 0.0
    %1452 = vmatprep.subr.mxu0 0.0
    %1453 = vmatpush2.msra.mxu0 0.0
    %1454 = vmatprep.mubr.f32.mxu0 0.0
    %1455 = vmatmul.mubr.f32.gmra.mxu0 %v1314
    %v1456 = vpop.f32.mrf.mxu0
    %v1457 = vadd.f32 0.0, %v1456
    %v1458 = vpop.f32.mrf.mxu0
    %v1459 = vadd.f32 0.0, %v1458
    %1460 = vdwg.mxu0
    %v1461 = vadd.f32 %v1315, %v1386
    %v1462 = vadd.f32 %v1316, %v1388
    %v1463 = vadd.f32 %v1317, %v1457
    %v1464 = vadd.f32 %v1318, %v1459
    %v1465 = vxor.u32 %v1461, 2147483648
    %v1466 = vmul.f32 %v1465, 1.442695
    %v1467 = vpow.pop %v1466
    %v1468 = vadd.f32 %v1467, 1.0
    %v1469 = vrcp.pop %v1468
    %v1470 = vmul.f32 1.0, %v1469
    %v1471 = vxor.u32 %v1462, 2147483648
    %v1472 = vmul.f32 %v1471, 1.442695
    %v1473 = vpow.pop %v1472
    %v1474 = vadd.f32 %v1473, 1.0
    %v1475 = vrcp.pop %v1474
    %v1476 = vmul.f32 1.0, %v1475
    %v1477 = vtanh.pop %v1463
    %v1478 = vxor.u32 %v1464, 2147483648
    %v1479 = vmul.f32 %v1478, 1.442695
    %v1480 = vpow.pop %v1479
    %v1481 = vadd.f32 %v1480, 1.0
    %v1482 = vrcp.pop %v1481
    %v1483 = vmul.f32 1.0, %v1482
    %v1484 = vmul.f32 %v1476, %v1312
    %v1485 = vmul.f32 %v1470, %v1477
    %v1486 = vadd.f32 %v1484, %v1485
    %v1487 = vtanh.pop %v1486
    %v1488 = vmul.f32 %v1483, %v1487
    %v1489 = vld [vmem:[#allocation2 + $0xc0] sm:$0xff]
    %v1490 = vld [vmem:[#allocation2 + $0xc8] sm:$0xff]
    %v1491 = vld [vmem:[#allocation2 + $0xd0] sm:$0xff]
    %v1492 = vld [vmem:[#allocation2 + $0xd8] sm:$0xff]
    %1493 = vmatprep.subr.mxu0 %v446
    %1494 = vmatpush1.msra.mxu0 %v445
    %1495 = vmatprep.subr.mxu0 %v442
    %1496 = vmatpush1.msra.mxu0 %v441
    %1497 = vmatprep.subr.mxu0 %v438
    %1498 = vmatpush1.msra.mxu0 %v437
    %1499 = vmatprep.subr.mxu0 %v434
    %1500 = vmatpush1.msra.mxu0 %v433
    %1501 = vmatprep.subr.mxu0 %v430
    %1502 = vmatpush1.msra.mxu0 %v429
    %1503 = vmatprep.subr.mxu0 %v426
    %1504 = vmatpush1.msra.mxu0 %v425
    %1505 = vmatprep.subr.mxu0 %v422
    %1506 = vmatpush1.msra.mxu0 %v421
    %1507 = vmatprep.subr.mxu0 %v418
    %1508 = vmatpush1.msra.mxu0 %v417
    %1509 = vmatprep.subr.mxu0 %v414
    %1510 = vmatpush1.msra.mxu0 %v413
    %1511 = vmatprep.subr.mxu0 %v410
    %1512 = vmatpush1.msra.mxu0 %v409
    %1513 = vmatprep.subr.mxu0 %v406
    %1514 = vmatpush1.msra.mxu0 %v405
    %1515 = vmatprep.subr.mxu0 %v402
    %1516 = vmatpush1.msra.mxu0 %v401
    %1517 = vmatprep.subr.mxu0 %v398
    %1518 = vmatpush1.msra.mxu0 %v397
    %1519 = vmatprep.subr.mxu0 %v394
    %1520 = vmatpush1.msra.mxu0 %v393
    %1521 = vmatprep.subr.mxu0 %v390
    %1522 = vmatpush1.msra.mxu0 %v389
    %1523 = vmatprep.subr.mxu0 %v386
    %1524 = vmatpush1.msra.mxu0 %v385
    %1525 = vmatprep.subr.mxu0 0.0
    %1526 = vmatpush2.msra.mxu0 0.0
    %1527 = vmatprep.subr.mxu0 0.0
    %1528 = vmatpush2.msra.mxu0 0.0
    %1529 = vmatprep.subr.mxu0 0.0
    %1530 = vmatpush2.msra.mxu0 0.0
    %1531 = vmatprep.subr.mxu0 0.0
    %1532 = vmatpush2.msra.mxu0 0.0
    %1533 = vmatprep.subr.mxu0 0.0
    %1534 = vmatpush2.msra.mxu0 0.0
    %1535 = vmatprep.subr.mxu0 0.0
    %1536 = vmatpush2.msra.mxu0 0.0
    %1537 = vmatprep.subr.mxu0 0.0
    %1538 = vmatpush2.msra.mxu0 0.0
    %1539 = vmatprep.subr.mxu0 0.0
    %1540 = vmatpush2.msra.mxu0 0.0
    %1541 = vmatprep.subr.mxu0 0.0
    %1542 = vmatpush2.msra.mxu0 0.0
    %1543 = vmatprep.subr.mxu0 0.0
    %1544 = vmatpush2.msra.mxu0 0.0
    %1545 = vmatprep.subr.mxu0 0.0
    %1546 = vmatpush2.msra.mxu0 0.0
    %1547 = vmatprep.subr.mxu0 0.0
    %1548 = vmatpush2.msra.mxu0 0.0
    %1549 = vmatprep.subr.mxu0 0.0
    %1550 = vmatpush2.msra.mxu0 0.0
    %1551 = vmatprep.subr.mxu0 0.0
    %1552 = vmatpush2.msra.mxu0 0.0
    %1553 = vmatprep.subr.mxu0 0.0
    %1554 = vmatpush2.msra.mxu0 0.0
    %1555 = vmatprep.subr.mxu0 0.0
    %1556 = vmatpush2.msra.mxu0 0.0
    %1557 = vmatprep.mubr.f32.mxu0 0.0
    %1558 = vmatmul.mubr.f32.gmra.mxu0 %v1488
    %v1559 = vpop.f32.mrf.mxu0
    %v1560 = vadd.f32 0.0, %v1559
    %v1561 = vpop.f32.mrf.mxu0
    %v1562 = vadd.f32 0.0, %v1561
    %1563 = vdwg.mxu0
    %1564 = vmatprep.subr.mxu0 %v448
    %1565 = vmatpush1.msra.mxu0 %v447
    %1566 = vmatprep.subr.mxu0 %v444
    %1567 = vmatpush1.msra.mxu0 %v443
    %1568 = vmatprep.subr.mxu0 %v440
    %1569 = vmatpush1.msra.mxu0 %v439
    %1570 = vmatprep.subr.mxu0 %v436
    %1571 = vmatpush1.msra.mxu0 %v435
    %1572 = vmatprep.subr.mxu0 %v432
    %1573 = vmatpush1.msra.mxu0 %v431
    %1574 = vmatprep.subr.mxu0 %v428
    %1575 = vmatpush1.msra.mxu0 %v427
    %1576 = vmatprep.subr.mxu0 %v424
    %1577 = vmatpush1.msra.mxu0 %v423
    %1578 = vmatprep.subr.mxu0 %v420
    %1579 = vmatpush1.msra.mxu0 %v419
    %1580 = vmatprep.subr.mxu0 %v416
    %1581 = vmatpush1.msra.mxu0 %v415
    %1582 = vmatprep.subr.mxu0 %v412
    %1583 = vmatpush1.msra.mxu0 %v411
    %1584 = vmatprep.subr.mxu0 %v408
    %1585 = vmatpush1.msra.mxu0 %v407
    %1586 = vmatprep.subr.mxu0 %v404
    %1587 = vmatpush1.msra.mxu0 %v403
    %1588 = vmatprep.subr.mxu0 %v400
    %1589 = vmatpush1.msra.mxu0 %v399
    %1590 = vmatprep.subr.mxu0 %v396
    %1591 = vmatpush1.msra.mxu0 %v395
    %1592 = vmatprep.subr.mxu0 %v392
    %1593 = vmatpush1.msra.mxu0 %v391
    %1594 = vmatprep.subr.mxu0 %v388
    %1595 = vmatpush1.msra.mxu0 %v387
    %1596 = vmatprep.subr.mxu0 0.0
    %1597 = vmatpush2.msra.mxu0 0.0
    %1598 = vmatprep.subr.mxu0 0.0
    %1599 = vmatpush2.msra.mxu0 0.0
    %1600 = vmatprep.subr.mxu0 0.0
    %1601 = vmatpush2.msra.mxu0 0.0
    %1602 = vmatprep.subr.mxu0 0.0
    %1603 = vmatpush2.msra.mxu0 0.0
    %1604 = vmatprep.subr.mxu0 0.0
    %1605 = vmatpush2.msra.mxu0 0.0
    %1606 = vmatprep.subr.mxu0 0.0
    %1607 = vmatpush2.msra.mxu0 0.0
    %1608 = vmatprep.subr.mxu0 0.0
    %1609 = vmatpush2.msra.mxu0 0.0
    %1610 = vmatprep.subr.mxu0 0.0
    %1611 = vmatpush2.msra.mxu0 0.0
    %1612 = vmatprep.subr.mxu0 0.0
    %1613 = vmatpush2.msra.mxu0 0.0
    %1614 = vmatprep.subr.mxu0 0.0
    %1615 = vmatpush2.msra.mxu0 0.0
    %1616 = vmatprep.subr.mxu0 0.0
    %1617 = vmatpush2.msra.mxu0 0.0
    %1618 = vmatprep.subr.mxu0 0.0
    %1619 = vmatpush2.msra.mxu0 0.0
    %1620 = vmatprep.subr.mxu0 0.0
    %1621 = vmatpush2.msra.mxu0 0.0
    %1622 = vmatprep.subr.mxu0 0.0
    %1623 = vmatpush2.msra.mxu0 0.0
    %1624 = vmatprep.subr.mxu0 0.0
    %1625 = vmatpush2.msra.mxu0 0.0
    %1626 = vmatprep.subr.mxu0 0.0
    %1627 = vmatpush2.msra.mxu0 0.0
    %1628 = vmatprep.mubr.f32.mxu0 0.0
    %1629 = vmatmul.mubr.f32.gmra.mxu0 %v1488
    %v1630 = vpop.f32.mrf.mxu0
    %v1631 = vadd.f32 0.0, %v1630
    %v1632 = vpop.f32.mrf.mxu0
    %v1633 = vadd.f32 0.0, %v1632
    %1634 = vdwg.mxu0
    %v1635 = vadd.f32 %v1489, %v1560
    %v1636 = vadd.f32 %v1490, %v1562
    %v1637 = vadd.f32 %v1491, %v1631
    %v1638 = vadd.f32 %v1492, %v1633
    %v1639 = vxor.u32 %v1635, 2147483648
    %v1640 = vmul.f32 %v1639, 1.442695
    %v1641 = vpow.pop %v1640
    %v1642 = vadd.f32 %v1641, 1.0
    %v1643 = vrcp.pop %v1642
    %v1644 = vmul.f32 1.0, %v1643
    %v1645 = vxor.u32 %v1636, 2147483648
    %v1646 = vmul.f32 %v1645, 1.442695
    %v1647 = vpow.pop %v1646
    %v1648 = vadd.f32 %v1647, 1.0
    %v1649 = vrcp.pop %v1648
    %v1650 = vmul.f32 1.0, %v1649
    %v1651 = vtanh.pop %v1637
    %v1652 = vxor.u32 %v1638, 2147483648
    %v1653 = vmul.f32 %v1652, 1.442695
    %v1654 = vpow.pop %v1653
    %v1655 = vadd.f32 %v1654, 1.0
    %v1656 = vrcp.pop %v1655
    %v1657 = vmul.f32 1.0, %v1656
    %v1658 = vmul.f32 %v1650, %v1486
    %v1659 = vmul.f32 %v1644, %v1651
    %v1660 = vadd.f32 %v1658, %v1659
    %v1661 = vtanh.pop %v1660
    %v1662 = vmul.f32 %v1657, %v1661
    %v1663 = vld [vmem:[#allocation2 + $0xe0] sm:$0xff]
    %v1664 = vld [vmem:[#allocation2 + $0xe8] sm:$0xff]
    %v1665 = vld [vmem:[#allocation2 + $0xf0] sm:$0xff]
    %v1666 = vld [vmem:[#allocation2 + $0xf8] sm:$0xff]
    %1667 = vmatprep.subr.mxu0 %v446
    %1668 = vmatpush1.msra.mxu0 %v445
    %1669 = vmatprep.subr.mxu0 %v442
    %1670 = vmatpush1.msra.mxu0 %v441
    %1671 = vmatprep.subr.mxu0 %v438
    %1672 = vmatpush1.msra.mxu0 %v437
    %1673 = vmatprep.subr.mxu0 %v434
    %1674 = vmatpush1.msra.mxu0 %v433
    %1675 = vmatprep.subr.mxu0 %v430
    %1676 = vmatpush1.msra.mxu0 %v429
    %1677 = vmatprep.subr.mxu0 %v426
    %1678 = vmatpush1.msra.mxu0 %v425
    %1679 = vmatprep.subr.mxu0 %v422
    %1680 = vmatpush1.msra.mxu0 %v421
    %1681 = vmatprep.subr.mxu0 %v418
    %1682 = vmatpush1.msra.mxu0 %v417
    %1683 = vmatprep.subr.mxu0 %v414
    %1684 = vmatpush1.msra.mxu0 %v413
    %1685 = vmatprep.subr.mxu0 %v410
    %1686 = vmatpush1.msra.mxu0 %v409
    %1687 = vmatprep.subr.mxu0 %v406
    %1688 = vmatpush1.msra.mxu0 %v405
    %1689 = vmatprep.subr.mxu0 %v402
    %1690 = vmatpush1.msra.mxu0 %v401
    %1691 = vmatprep.subr.mxu0 %v398
    %1692 = vmatpush1.msra.mxu0 %v397
    %1693 = vmatprep.subr.mxu0 %v394
    %1694 = vmatpush1.msra.mxu0 %v393
    %1695 = vmatprep.subr.mxu0 %v390
    %1696 = vmatpush1.msra.mxu0 %v389
    %1697 = vmatprep.subr.mxu0 %v386
    %1698 = vmatpush1.msra.mxu0 %v385
    %1699 = vmatprep.subr.mxu0 0.0
    %1700 = vmatpush2.msra.mxu0 0.0
    %1701 = vmatprep.subr.mxu0 0.0
    %1702 = vmatpush2.msra.mxu0 0.0
    %1703 = vmatprep.subr.mxu0 0.0
    %1704 = vmatpush2.msra.mxu0 0.0
    %1705 = vmatprep.subr.mxu0 0.0
    %1706 = vmatpush2.msra.mxu0 0.0
    %1707 = vmatprep.subr.mxu0 0.0
    %1708 = vmatpush2.msra.mxu0 0.0
    %1709 = vmatprep.subr.mxu0 0.0
    %1710 = vmatpush2.msra.mxu0 0.0
    %1711 = vmatprep.subr.mxu0 0.0
    %1712 = vmatpush2.msra.mxu0 0.0
    %1713 = vmatprep.subr.mxu0 0.0
    %1714 = vmatpush2.msra.mxu0 0.0
    %1715 = vmatprep.subr.mxu0 0.0
    %1716 = vmatpush2.msra.mxu0 0.0
    %1717 = vmatprep.subr.mxu0 0.0
    %1718 = vmatpush2.msra.mxu0 0.0
    %1719 = vmatprep.subr.mxu0 0.0
    %1720 = vmatpush2.msra.mxu0 0.0
    %1721 = vmatprep.subr.mxu0 0.0
    %1722 = vmatpush2.msra.mxu0 0.0
    %1723 = vmatprep.subr.mxu0 0.0
    %1724 = vmatpush2.msra.mxu0 0.0
    %1725 = vmatprep.subr.mxu0 0.0
    %1726 = vmatpush2.msra.mxu0 0.0
    %1727 = vmatprep.subr.mxu0 0.0
    %1728 = vmatpush2.msra.mxu0 0.0
    %1729 = vmatprep.subr.mxu0 0.0
    %1730 = vmatpush2.msra.mxu0 0.0
    %1731 = vmatprep.mubr.f32.mxu0 0.0
    %1732 = vmatmul.mubr.f32.gmra.mxu0 %v1662
    %v1733 = vpop.f32.mrf.mxu0
    %v1734 = vadd.f32 0.0, %v1733
    %v1735 = vpop.f32.mrf.mxu0
    %v1736 = vadd.f32 0.0, %v1735
    %1737 = vdwg.mxu0
    %1738 = vmatprep.subr.mxu0 %v448
    %1739 = vmatpush1.msra.mxu0 %v447
    %1740 = vmatprep.subr.mxu0 %v444
    %1741 = vmatpush1.msra.mxu0 %v443
    %1742 = vmatprep.subr.mxu0 %v440
    %1743 = vmatpush1.msra.mxu0 %v439
    %1744 = vmatprep.subr.mxu0 %v436
    %1745 = vmatpush1.msra.mxu0 %v435
    %1746 = vmatprep.subr.mxu0 %v432
    %1747 = vmatpush1.msra.mxu0 %v431
    %1748 = vmatprep.subr.mxu0 %v428
    %1749 = vmatpush1.msra.mxu0 %v427
    %1750 = vmatprep.subr.mxu0 %v424
    %1751 = vmatpush1.msra.mxu0 %v423
    %1752 = vmatprep.subr.mxu0 %v420
    %1753 = vmatpush1.msra.mxu0 %v419
    %1754 = vmatprep.subr.mxu0 %v416
    %1755 = vmatpush1.msra.mxu0 %v415
    %1756 = vmatprep.subr.mxu0 %v412
    %1757 = vmatpush1.msra.mxu0 %v411
    %1758 = vmatprep.subr.mxu0 %v408
    %1759 = vmatpush1.msra.mxu0 %v407
    %1760 = vmatprep.subr.mxu0 %v404
    %1761 = vmatpush1.msra.mxu0 %v403
    %1762 = vmatprep.subr.mxu0 %v400
    %1763 = vmatpush1.msra.mxu0 %v399
    %1764 = vmatprep.subr.mxu0 %v396
    %1765 = vmatpush1.msra.mxu0 %v395
    %1766 = vmatprep.subr.mxu0 %v392
    %1767 = vmatpush1.msra.mxu0 %v391
    %1768 = vmatprep.subr.mxu0 %v388
    %1769 = vmatpush1.msra.mxu0 %v387
    %1770 = vmatprep.subr.mxu0 0.0
    %1771 = vmatpush2.msra.mxu0 0.0
    %1772 = vmatprep.subr.mxu0 0.0
    %1773 = vmatpush2.msra.mxu0 0.0
    %1774 = vmatprep.subr.mxu0 0.0
    %1775 = vmatpush2.msra.mxu0 0.0
    %1776 = vmatprep.subr.mxu0 0.0
    %1777 = vmatpush2.msra.mxu0 0.0
    %1778 = vmatprep.subr.mxu0 0.0
    %1779 = vmatpush2.msra.mxu0 0.0
    %1780 = vmatprep.subr.mxu0 0.0
    %1781 = vmatpush2.msra.mxu0 0.0
    %1782 = vmatprep.subr.mxu0 0.0
    %1783 = vmatpush2.msra.mxu0 0.0
    %1784 = vmatprep.subr.mxu0 0.0
    %1785 = vmatpush2.msra.mxu0 0.0
    %1786 = vmatprep.subr.mxu0 0.0
    %1787 = vmatpush2.msra.mxu0 0.0
    %1788 = vmatprep.subr.mxu0 0.0
    %1789 = vmatpush2.msra.mxu0 0.0
    %1790 = vmatprep.subr.mxu0 0.0
    %1791 = vmatpush2.msra.mxu0 0.0
    %1792 = vmatprep.subr.mxu0 0.0
    %1793 = vmatpush2.msra.mxu0 0.0
    %1794 = vmatprep.subr.mxu0 0.0
    %1795 = vmatpush2.msra.mxu0 0.0
    %1796 = vmatprep.subr.mxu0 0.0
    %1797 = vmatpush2.msra.mxu0 0.0
    %1798 = vmatprep.subr.mxu0 0.0
    %1799 = vmatpush2.msra.mxu0 0.0
    %1800 = vmatprep.subr.mxu0 0.0
    %1801 = vmatpush2.msra.mxu0 0.0
    %1802 = vmatprep.mubr.f32.mxu0 0.0
    %1803 = vmatmul.mubr.f32.gmra.mxu0 %v1662
    %v1804 = vpop.f32.mrf.mxu0
    %v1805 = vadd.f32 0.0, %v1804
    %v1806 = vpop.f32.mrf.mxu0
    %v1807 = vadd.f32 0.0, %v1806
    %1808 = vdwg.mxu0
    %v1809 = vadd.f32 %v1663, %v1734
    %v1810 = vadd.f32 %v1664, %v1736
    %v1811 = vadd.f32 %v1665, %v1805
    %v1812 = vadd.f32 %v1666, %v1807
    %v1813 = vxor.u32 %v1809, 2147483648
    %v1814 = vmul.f32 %v1813, 1.442695
    %v1815 = vpow.pop %v1814
    %v1816 = vadd.f32 %v1815, 1.0
    %v1817 = vrcp.pop %v1816
    %v1818 = vmul.f32 1.0, %v1817
    %v1819 = vxor.u32 %v1810, 2147483648
    %v1820 = vmul.f32 %v1819, 1.442695
    %v1821 = vpow.pop %v1820
    %v1822 = vadd.f32 %v1821, 1.0
    %v1823 = vrcp.pop %v1822
    %v1824 = vmul.f32 1.0, %v1823
    %v1825 = vtanh.pop %v1811
    %v1826 = vxor.u32 %v1812, 2147483648
    %v1827 = vmul.f32 %v1826, 1.442695
    %v1828 = vpow.pop %v1827
    %v1829 = vadd.f32 %v1828, 1.0
    %v1830 = vrcp.pop %v1829
    %v1831 = vmul.f32 1.0, %v1830
    %v1832 = vmul.f32 %v1824, %v1660
    %v1833 = vmul.f32 %v1818, %v1825
    %v1834 = vadd.f32 %v1832, %v1833
    %v1835 = vtanh.pop %v1834
    %v1836 = vmul.f32 %v1831, %v1835
    %v1837 = vld [vmem:[#allocation5] sm:$0xff]
    %v1838 = vld [vmem:[#allocation5 + $0x8] sm:$0xff]
    %v1839 = vld [vmem:[#allocation5 + $0x10] sm:$0xff]
    %v1840 = vld [vmem:[#allocation5 + $0x18] sm:$0xff]
    %v1841 = vld [vmem:[#allocation5 + $0x20] sm:$0xff]
    %v1842 = vld [vmem:[#allocation5 + $0x28] sm:$0xff]
    %v1843 = vld [vmem:[#allocation5 + $0x30] sm:$0xff]
    %v1844 = vld [vmem:[#allocation5 + $0x38] sm:$0xff]
    %v1845 = vld [vmem:[#allocation5 + $0x40] sm:$0xff]
    %v1846 = vld [vmem:[#allocation5 + $0x48] sm:$0xff]
    %v1847 = vld [vmem:[#allocation5 + $0x50] sm:$0xff]
    %v1848 = vld [vmem:[#allocation5 + $0x58] sm:$0xff]
    %v1849 = vld [vmem:[#allocation5 + $0x60] sm:$0xff]
    %v1850 = vld [vmem:[#allocation5 + $0x68] sm:$0xff]
    %v1851 = vld [vmem:[#allocation5 + $0x70] sm:$0xff]
    %v1852 = vld [vmem:[#allocation5 + $0x78] sm:$0xff]
    %v1853 = vld [vmem:[%s5] sm:$0x1]
    %v1855 = vlaneseq
    %v1856 = vshrl.u32 %v1855, 7
    %v1857 = vsub.s32 0, %v1856
    %v1858 = vrot.slane %v1853, %v1857
    %1860 = vmatprep.subr.mxu0 0.0
    %1861 = vmatpush1.msra.mxu0 %v1852
    %1862 = vmatprep.subr.mxu0 0.0
    %1863 = vmatpush1.msra.mxu0 %v1851
    %1864 = vmatprep.subr.mxu0 0.0
    %1865 = vmatpush1.msra.mxu0 %v1850
    %1866 = vmatprep.subr.mxu0 0.0
    %1867 = vmatpush1.msra.mxu0 %v1849
    %1868 = vmatprep.subr.mxu0 0.0
    %1869 = vmatpush1.msra.mxu0 %v1848
    %1870 = vmatprep.subr.mxu0 0.0
    %1871 = vmatpush1.msra.mxu0 %v1847
    %1872 = vmatprep.subr.mxu0 0.0
    %1873 = vmatpush1.msra.mxu0 %v1846
    %1874 = vmatprep.subr.mxu0 0.0
    %1875 = vmatpush1.msra.mxu0 %v1845
    %1876 = vmatprep.subr.mxu0 0.0
    %1877 = vmatpush1.msra.mxu0 %v1844
    %1878 = vmatprep.subr.mxu0 0.0
    %1879 = vmatpush1.msra.mxu0 %v1843
    %1880 = vmatprep.subr.mxu0 0.0
    %1881 = vmatpush1.msra.mxu0 %v1842
    %1882 = vmatprep.subr.mxu0 0.0
    %1883 = vmatpush1.msra.mxu0 %v1841
    %1884 = vmatprep.subr.mxu0 0.0
    %1885 = vmatpush1.msra.mxu0 %v1840
    %1886 = vmatprep.subr.mxu0 0.0
    %1887 = vmatpush1.msra.mxu0 %v1839
    %1888 = vmatprep.subr.mxu0 0.0
    %1889 = vmatpush1.msra.mxu0 %v1838
    %1890 = vmatprep.subr.mxu0 0.0
    %1891 = vmatpush1.msra.mxu0 %v1837
    %1892 = vmatprep.subr.mxu0 0.0
    %1893 = vmatpush2.msra.mxu0 0.0
    %1894 = vmatprep.subr.mxu0 0.0
    %1895 = vmatpush2.msra.mxu0 0.0
    %1896 = vmatprep.subr.mxu0 0.0
    %1897 = vmatpush2.msra.mxu0 0.0
    %1898 = vmatprep.subr.mxu0 0.0
    %1899 = vmatpush2.msra.mxu0 0.0
    %1900 = vmatprep.subr.mxu0 0.0
    %1901 = vmatpush2.msra.mxu0 0.0
    %1902 = vmatprep.subr.mxu0 0.0
    %1903 = vmatpush2.msra.mxu0 0.0
    %1904 = vmatprep.subr.mxu0 0.0
    %1905 = vmatpush2.msra.mxu0 0.0
    %1906 = vmatprep.subr.mxu0 0.0
    %1907 = vmatpush2.msra.mxu0 0.0
    %1908 = vmatprep.subr.mxu0 0.0
    %1909 = vmatpush2.msra.mxu0 0.0
    %1910 = vmatprep.subr.mxu0 0.0
    %1911 = vmatpush2.msra.mxu0 0.0
    %1912 = vmatprep.subr.mxu0 0.0
    %1913 = vmatpush2.msra.mxu0 0.0
    %1914 = vmatprep.subr.mxu0 0.0
    %1915 = vmatpush2.msra.mxu0 0.0
    %1916 = vmatprep.subr.mxu0 0.0
    %1917 = vmatpush2.msra.mxu0 0.0
    %1918 = vmatprep.subr.mxu0 0.0
    %1919 = vmatpush2.msra.mxu0 0.0
    %1920 = vmatprep.subr.mxu0 0.0
    %1921 = vmatpush2.msra.mxu0 0.0
    %1922 = vmatprep.subr.mxu0 0.0
    %1923 = vmatpush2.msra.mxu0 0.0
    %1924 = vmatprep.mubr.f32.mxu0 0.0
    %1925 = vmatmul.mubr.f32.gmra.mxu0 %v1836
    %v1926 = vpop.f32.mrf.mxu0
    %v1927 = vadd.f32 %v1858, %v1926
    %v1928 = vpop.f32.mrf.mxu0
    %1929 = vdwg.mxu0
    %1930 = vst [vmem:[%s6] sm:$0xff] %v1927
    // Predicated region
    $region34: #{lstm_classifier_fwd.1} parent=1 // pred_check
      _
    $region35: #{lstm_classifier_fwd.1} parent=1 // pred_check_branch
      %1932 = sbr.rel (0) target = $region37
    $region36: #{lstm_classifier_fwd.1} parent=1 // pred_region
      _
    $region37: #{lstm_classifier_fwd.1} parent=1 // pred_fallthru
      _
    // Predicated region
    $region38: #{lstm_classifier_fwd.1} parent=1 // pred_check
      _
    $region39: #{lstm_classifier_fwd.1} parent=1 // pred_check_branch
      %1934 = sbr.rel (0) target = $region41
    $region40: #{lstm_classifier_fwd.1} parent=1 // pred_region
      _
    $region41: #{lstm_classifier_fwd.1} parent=1 // pred_fallthru
      _
    %1935 = vsyncpa [#allocation4], 1
    %1936 = vsyncpa [#allocation6], 1

</llo_original>
